<compile_context>
chip_gen: v5e
topology: v5e:2x2
jax: 0.10.0
libtpu: 0.0.40
codegen_flags: <defaults>
</compile_context>

<pallas_src>
import jax
import jax.numpy as jnp
import numpy as np
from jax.experimental import pallas as pl
from jax.experimental.pallas import tpu as pltpu

LEAKY_CONV = 0.2          # F.leaky_relu(x, 0.2) after the convs
LEAKY_OUT = 0.01          # F.leaky_relu default slope after BN
BN_EPS = 1e-5
FEATURE_SIZE = 120
OUT_COLS = 128            # lane-dense kernel output width (>= feature_size)

# ---- packed-parameter layouts (all lane widths are multiples of 128) --------
# p1 (bf16, 128 x 640): conv1 folded to a dense 125 -> 640 map.
#   output column = oh*128 + ow*20 + co   (columns with col%128 >= 100 are zero pad)
P1_W1 = 0
P1_W1_ROWS = 125
P1_ROWS = 128
P1_COLS = 640
# p2 (bf16, 560 x 128): conv2 folded map + fc1 weights.
#   conv2 input row = ph*128 + pw*20 + ci ; output column = oh*60 + ow*30 + co
P2_W2 = 0
P2_W2_ROWS = 492          # matches the width of the pooled feature row `u`
P2_WFX = 496              # fc1 weight for the 30 conv features
P2_WFA = 528              # fc1 weight for the 19 action features
P2_ROWS = 560
P2_COLS = 128
# pvec (f32, 8 x 640): small per-feature vectors (kept f32; ~20 KB).
PV_B1 = 0                 # conv1 bias tiled over the 25 spatial positions (640 wide)
PV_B2 = 1                 # conv2 bias tiled over the 4 spatial positions (cols 0..119)
PV_BF = 2                 # fc1 bias
PV_GAMMA = 3              # BN weight  (0 in the 8 pad columns)
PV_BETA = 4               # BN bias
PV_ROWS = 8


def _leaky(v, slope):
    return jnp.where(v > 0, v, slope * v)


# ----------------------------------------------------------------------------
# The single fused kernel
# ----------------------------------------------------------------------------
def critic_encoder_kernel(state_ref, action_ref, p1_ref, p2_ref, pvec_ref, out_ref):
    xb = state_ref[...].astype(jnp.bfloat16)                  # (B, 125)
    ab = action_ref[...].astype(jnp.bfloat16)                 # (B, 19)

    # conv1(3x3, pad=1) + bias as one bf16 MXU matmul (f32 accumulate).
    y1 = jnp.dot(xb, p1_ref[P1_W1:P1_W1 + P1_W1_ROWS, :],
                 preferred_element_type=jnp.float32)
    y1 = y1 + pvec_ref[PV_B1:PV_B1 + 1, :]                    # (B, 640) f32
    y1 = _leaky(y1, LEAKY_CONV)

    # MaxPool2d(2, stride=1): h-shift is a whole-vreg (128-lane) offset, so it is
    # just a different vreg slice; only the 20-lane w-shift needs a lane rotate.
    t = jnp.maximum(y1[:, 0:512], y1[:, 128:640])             # (B, 512)
    u = jnp.maximum(t[:, 0:492], t[:, 20:512])                # (B, 492)
    # columns of u with (col % 128) >= 80 hold wrap junk; conv2's folded matrix
    # has all-zero rows there, so they are never read.

    # conv2(3x3, valid) + bias as one bf16 MXU matmul.
    y2 = jnp.dot(u.astype(jnp.bfloat16), p2_ref[P2_W2:P2_W2 + P2_W2_ROWS, :],
                 preferred_element_type=jnp.float32)
    y2 = y2 + pvec_ref[PV_B2:PV_B2 + 1, 0:P2_COLS]
    y2 = _leaky(y2, LEAKY_CONV)                               # (B, 128); cols 120.. == 0

    # MaxPool2d(2, stride=1) on the 2x2 map -> 1x1: max of 4 channel slices.
    feat = jnp.maximum(jnp.maximum(y2[:, 0:30], y2[:, 30:60]),
                       jnp.maximum(y2[:, 60:90], y2[:, 90:120]))   # (B, 30)

    # fc1 on cat([feat, action]) as a split matmul (no in-kernel concat needed).
    y = (jnp.dot(feat.astype(jnp.bfloat16), p2_ref[P2_WFX:P2_WFX + 30, :],
                 preferred_element_type=jnp.float32)
         + jnp.dot(ab, p2_ref[P2_WFA:P2_WFA + 19, :],
                   preferred_element_type=jnp.float32)
         + pvec_ref[PV_BF:PV_BF + 1, 0:P2_COLS])               # (B, 128)

    # BatchNorm1d (train-mode batch statistics, biased variance) + leaky(0.01).
    # TODO(synk): running_mean/running_var buffer updates (training side effect)
    # are not tracked; this matches torch train-mode normalization only.
    gamma = pvec_ref[PV_GAMMA:PV_GAMMA + 1, 0:P2_COLS]
    beta = pvec_ref[PV_BETA:PV_BETA + 1, 0:P2_COLS]
    mean = jnp.mean(y, axis=0, keepdims=True)
    var = jnp.maximum(jnp.mean(y * y, axis=0, keepdims=True) - mean * mean, 0.0)
    yhat = (y - mean) * jax.lax.rsqrt(var + BN_EPS)
    out_ref[...] = _leaky(gamma * yhat + beta, LEAKY_OUT)


# ----------------------------------------------------------------------------
# Parameter setup (raw PyTorch-layout params) and ONE-TIME kernel-layout packing
# ----------------------------------------------------------------------------
def init_params(key, feature_size=FEATURE_SIZE):
    assert feature_size == FEATURE_SIZE, "packing layout assumes feature_size == 120"
    ks = jax.random.split(key, 6)
    return {
        "w1": jax.random.normal(ks[0], (20, 5, 3, 3), jnp.float32) / np.sqrt(5 * 9),
        "b1": 0.05 * jax.random.normal(ks[1], (20,), jnp.float32),
        "w2": jax.random.normal(ks[2], (30, 20, 3, 3), jnp.float32) / np.sqrt(20 * 9),
        "b2": 0.05 * jax.random.normal(ks[3], (30,), jnp.float32),
        "wf": jax.random.normal(ks[4], (feature_size, 49), jnp.float32) / np.sqrt(49),
        "bf": 0.05 * jax.random.normal(ks[5], (feature_size,), jnp.float32),
        "gamma": jnp.ones((feature_size,), jnp.float32),
        "beta": jnp.zeros((feature_size,), jnp.float32),
    }


def prepare_kernel_params(params):
    """One-time host-side packing into kernel layout (hoisted out of the forward)."""
    w1 = np.asarray(params["w1"], np.float32)   # (20, 5, 3, 3)  OIHW
    b1 = np.asarray(params["b1"], np.float32)   # (20,)
    w2 = np.asarray(params["w2"], np.float32)   # (30, 20, 3, 3) OIHW
    b2 = np.asarray(params["b2"], np.float32)   # (30,)
    wf = np.asarray(params["wf"], np.float32)   # (120, 49) torch Linear layout
    bf = np.asarray(params["bf"], np.float32)
    gamma = np.asarray(params["gamma"], np.float32)
    beta = np.asarray(params["beta"], np.float32)

    # conv1 (pad=1) as a dense (125 -> 640) map on the raw NCHW-flat state
    # (row = ci*25 + ih*5 + iw); output column = oh*128 + ow*20 + co.
    p1 = np.zeros((P1_ROWS, P1_COLS), np.float32)
    pvec = np.zeros((PV_ROWS, P1_COLS), np.float32)
    for oh in range(5):
        for ow in range(5):
            col = oh * 128 + ow * 20
            pvec[PV_B1, col:col + 20] = b1
            for kh in range(3):
                for kw in range(3):
                    ih, iw = oh + kh - 1, ow + kw - 1
                    if 0 <= ih < 5 and 0 <= iw < 5:
                        for ci in range(5):
                            p1[ci * 25 + ih * 5 + iw, col:col + 20] = w1[:, ci, kh, kw]

    # conv2 (valid) as a dense (492 -> 128) map on the pooled flat features
    # (input column = ph*128 + pw*20 + ci); output column = oh*60 + ow*30 + co.
    # The pool-junk input columns ((col % 128) >= 80) stay zero rows.
    p2 = np.zeros((P2_ROWS, P2_COLS), np.float32)
    for oh in range(2):
        for ow in range(2):
            col = oh * 60 + ow * 30
            for kh in range(3):
                for kw in range(3):
                    ph, pw = oh + kh, ow + kw
                    for ci in range(20):
                        p2[P2_W2 + ph * 128 + pw * 20 + ci, col:col + 30] = w2[:, ci, kh, kw]
    p2[P2_WFX:P2_WFX + 30, :FEATURE_SIZE] = wf[:, :30].T
    p2[P2_WFA:P2_WFA + 19, :FEATURE_SIZE] = wf[:, 30:].T

    pvec[PV_B2, :FEATURE_SIZE] = np.tile(b2, 4)
    pvec[PV_BF, :FEATURE_SIZE] = bf
    pvec[PV_GAMMA, :FEATURE_SIZE] = gamma        # pad columns stay 0
    pvec[PV_BETA, :FEATURE_SIZE] = beta

    return {"p1": jnp.asarray(p1, jnp.bfloat16),     # bf16 in HBM: half the DMA bytes
            "p2": jnp.asarray(p2, jnp.bfloat16),
            "pvec": jnp.asarray(pvec)}               # tiny, kept f32


# ----------------------------------------------------------------------------
# Forward: exactly one pallas_call (plus a trivial lane slice to feature_size).
# ----------------------------------------------------------------------------
@jax.jit
def critic_encoder_forward(state, action, kparams):
    """state: (B, 125) float32 (== torch state.view(B,5,5,5)); action: (B, 19)."""
    B = state.shape[0]
    vmem = pl.BlockSpec(memory_space=pltpu.MemorySpace.VMEM)
    # TODO(synk): a v7x two-TensorCore split over B would need a two-pass
    # cross-core BatchNorm reduction; at these sizes the call is launch-bound,
    # so the whole forward stays on one core with grid=().
    out = pl.pallas_call(
        critic_encoder_kernel,
        out_shape=jax.ShapeDtypeStruct((B, OUT_COLS), jnp.float32),
        in_specs=[vmem, vmem, vmem, vmem, vmem],
        out_specs=vmem,
    )(state, action, kparams["p1"], kparams["p2"], kparams["pvec"])
    return out[:, :FEATURE_SIZE]


# ----------------------------------------------------------------------------
# Pure-JAX reference mirroring the PyTorch forward (correctness check)
# ----------------------------------------------------------------------------
def _maxpool2_s1_nchw(x):
    return jnp.maximum(
        jnp.maximum(x[:, :, :-1, :-1], x[:, :, :-1, 1:]),
        jnp.maximum(x[:, :, 1:, :-1], x[:, :, 1:, 1:]))


@jax.jit
def ref_forward(state, action, p):
    B = state.shape[0]
    x = state.reshape(B, 5, 5, 5)
    x = jax.lax.conv_general_dilated(
        x, p["w1"], (1, 1), ((1, 1), (1, 1)),
        dimension_numbers=("NCHW", "OIHW", "NCHW")) + p["b1"].reshape(1, -1, 1, 1)
    x = _maxpool2_s1_nchw(_leaky(x, LEAKY_CONV))
    x = jax.lax.conv_general_dilated(
        x, p["w2"], (1, 1), ((0, 0), (0, 0)),
        dimension_numbers=("NCHW", "OIHW", "NCHW")) + p["b2"].reshape(1, -1, 1, 1)
    x = _maxpool2_s1_nchw(_leaky(x, LEAKY_CONV))
    x = x.reshape(-1, 30)
    x = jnp.concatenate([x, action], axis=1)
    y = jnp.dot(x, p["wf"].T) + p["bf"]
    mean = jnp.mean(y, axis=0, keepdims=True)
    var = jnp.mean((y - mean) ** 2, axis=0, keepdims=True)
    y = p["gamma"] * ((y - mean) / jnp.sqrt(var + BN_EPS)) + p["beta"]
    return _leaky(y, LEAKY_OUT)


if __name__ == "__main__":
    key = jax.random.PRNGKey(0)
    kp, ks, ka = jax.random.split(key, 3)
    params = init_params(kp)
    kparams = prepare_kernel_params(params)   # one-time packing, not per call

    B = 64   # larger effective batch per call (still tiny); BN stats are per-batch
    state = jax.random.normal(ks, (B, 125), jnp.float32)   # viewed as (B,5,5,5)
    action = jax.random.normal(ka, (B, 19), jnp.float32)

    out = jax.block_until_ready(critic_encoder_forward(state, action, kparams))
    ref = jax.block_until_ready(ref_forward(state, action, params))

    assert out.shape == (B, FEATURE_SIZE), out.shape
    max_err = float(jnp.max(jnp.abs(out - ref)))
    # Both paths run single-pass bf16 MXU matmuls (the kernel explicitly, the XLA
    # reference via default-precision TPU convs/dots), so a few-1e-2 absolute
    # tolerance is the expected numerical envelope after BatchNorm.
    assert max_err < 5e-2, f"kernel/reference mismatch: {max_err}"
    print("KERNEL_OK")
</pallas_src>

<mosaic_0001>
module attributes {stable_mosaic.version = 11 : i64} {
  func.func @critic_encoder_kernel(%arg0: memref<64x125xf32, #tpu.memory_space<vmem>>, %arg1: memref<64x19xf32, #tpu.memory_space<vmem>>, %arg2: memref<128x640xbf16, #tpu.memory_space<vmem>>, %arg3: memref<560x128xbf16, #tpu.memory_space<vmem>>, %arg4: memref<8x640xf32, #tpu.memory_space<vmem>>, %arg5: memref<64x128xf32, #tpu.memory_space<vmem>>) attributes {dimension_semantics = [], scalar_prefetch = 0 : i64, scratch_operands = 0 : i64, tpu.core_type = #tpu.core_type<tc>} {
    %c0 = arith.constant 0 : index
    %c0_0 = arith.constant 0 : index
    %0 = vector.load %arg0[%c0, %c0_0] : memref<64x125xf32, #tpu.memory_space<vmem>>, vector<64x125xf32>
    %1 = arith.truncf %0 : vector<64x125xf32> to vector<64x125xbf16>
    %c0_1 = arith.constant 0 : index
    %c0_2 = arith.constant 0 : index
    %2 = vector.load %arg1[%c0_1, %c0_2] : memref<64x19xf32, #tpu.memory_space<vmem>>, vector<64x19xf32>
    %3 = arith.truncf %2 : vector<64x19xf32> to vector<64x19xbf16>
    %c0_3 = arith.constant 0 : index
    %c0_4 = arith.constant 0 : index
    %4 = vector.load %arg2[%c0_3, %c0_4] : memref<128x640xbf16, #tpu.memory_space<vmem>>, vector<125x640xbf16>
    %cst = arith.constant dense<0.000000e+00> : vector<64x640xf32>
    %5 = tpu.matmul %1, %4, %cst {dimension_numbers = #tpu.dot_dimension_numbers<[1], [0], [0], [1], [0, 0, 1, 1], [], []>} : vector<64x125xbf16>, vector<125x640xbf16>, vector<64x640xf32> -> vector<64x640xf32>
    %c0_5 = arith.constant 0 : index
    %c0_6 = arith.constant 0 : index
    %6 = vector.load %arg4[%c0_5, %c0_6] : memref<8x640xf32, #tpu.memory_space<vmem>>, vector<1x640xf32>
    %7 = vector.broadcast %6 : vector<1x640xf32> to vector<64x640xf32>
    %8 = arith.addf %5, %7 : vector<64x640xf32>
    %cst_7 = arith.constant 0.000000e+00 : f32
    %9 = vector.broadcast %cst_7 : f32 to vector<64x640xf32>
    %10 = arith.cmpf ogt, %8, %9 : vector<64x640xf32>
    %cst_8 = arith.constant 2.000000e-01 : f32
    %11 = vector.broadcast %cst_8 : f32 to vector<64x640xf32>
    %12 = arith.mulf %11, %8 : vector<64x640xf32>
    %13 = arith.select %10, %8, %12 : vector<64x640xi1>, vector<64x640xf32>
    %14 = vector.extract_strided_slice %13 {offsets = [0, 0], sizes = [64, 512], strides = [1, 1]} : vector<64x640xf32> to vector<64x512xf32>
    %15 = vector.extract_strided_slice %13 {offsets = [0, 128], sizes = [64, 512], strides = [1, 1]} : vector<64x640xf32> to vector<64x512xf32>
    %16 = arith.maximumf %14, %15 : vector<64x512xf32>
    %17 = vector.extract_strided_slice %16 {offsets = [0, 0], sizes = [64, 492], strides = [1, 1]} : vector<64x512xf32> to vector<64x492xf32>
    %18 = vector.extract_strided_slice %16 {offsets = [0, 20], sizes = [64, 492], strides = [1, 1]} : vector<64x512xf32> to vector<64x492xf32>
    %19 = arith.maximumf %17, %18 : vector<64x492xf32>
    %20 = arith.truncf %19 : vector<64x492xf32> to vector<64x492xbf16>
    %c0_9 = arith.constant 0 : index
    %c0_10 = arith.constant 0 : index
    %21 = vector.load %arg3[%c0_9, %c0_10] : memref<560x128xbf16, #tpu.memory_space<vmem>>, vector<492x128xbf16>
    %cst_11 = arith.constant dense<0.000000e+00> : vector<64x128xf32>
    %22 = tpu.matmul %20, %21, %cst_11 {dimension_numbers = #tpu.dot_dimension_numbers<[1], [0], [0], [1], [0, 0, 1, 1], [], []>} : vector<64x492xbf16>, vector<492x128xbf16>, vector<64x128xf32> -> vector<64x128xf32>
    %c1 = arith.constant 1 : index
    %c0_12 = arith.constant 0 : index
    %23 = vector.load %arg4[%c1, %c0_12] : memref<8x640xf32, #tpu.memory_space<vmem>>, vector<1x128xf32>
    %24 = vector.broadcast %23 : vector<1x128xf32> to vector<64x128xf32>
    %25 = arith.addf %22, %24 : vector<64x128xf32>
    %cst_13 = arith.constant 0.000000e+00 : f32
    %26 = vector.broadcast %cst_13 : f32 to vector<64x128xf32>
    %27 = arith.cmpf ogt, %25, %26 : vector<64x128xf32>
    %cst_14 = arith.constant 2.000000e-01 : f32
    %28 = vector.broadcast %cst_14 : f32 to vector<64x128xf32>
    %29 = arith.mulf %28, %25 : vector<64x128xf32>
    %30 = arith.select %27, %25, %29 : vector<64x128xi1>, vector<64x128xf32>
    %31 = vector.extract_strided_slice %30 {offsets = [0, 0], sizes = [64, 30], strides = [1, 1]} : vector<64x128xf32> to vector<64x30xf32>
    %32 = vector.extract_strided_slice %30 {offsets = [0, 30], sizes = [64, 30], strides = [1, 1]} : vector<64x128xf32> to vector<64x30xf32>
    %33 = arith.maximumf %31, %32 : vector<64x30xf32>
    %34 = vector.extract_strided_slice %30 {offsets = [0, 60], sizes = [64, 30], strides = [1, 1]} : vector<64x128xf32> to vector<64x30xf32>
    %35 = vector.extract_strided_slice %30 {offsets = [0, 90], sizes = [64, 30], strides = [1, 1]} : vector<64x128xf32> to vector<64x30xf32>
    %36 = arith.maximumf %34, %35 : vector<64x30xf32>
    %37 = arith.maximumf %33, %36 : vector<64x30xf32>
    %38 = arith.truncf %37 : vector<64x30xf32> to vector<64x30xbf16>
    %c496 = arith.constant 496 : index
    %c0_15 = arith.constant 0 : index
    %39 = vector.load %arg3[%c496, %c0_15] : memref<560x128xbf16, #tpu.memory_space<vmem>>, vector<30x128xbf16>
    %cst_16 = arith.constant dense<0.000000e+00> : vector<64x128xf32>
    %40 = tpu.matmul %38, %39, %cst_16 {dimension_numbers = #tpu.dot_dimension_numbers<[1], [0], [0], [1], [0, 0, 1, 1], [], []>} : vector<64x30xbf16>, vector<30x128xbf16>, vector<64x128xf32> -> vector<64x128xf32>
    %c528 = arith.constant 528 : index
    %c0_17 = arith.constant 0 : index
    %41 = vector.load %arg3[%c528, %c0_17] : memref<560x128xbf16, #tpu.memory_space<vmem>>, vector<19x128xbf16>
    %cst_18 = arith.constant dense<0.000000e+00> : vector<64x128xf32>
    %42 = tpu.matmul %3, %41, %cst_18 {dimension_numbers = #tpu.dot_dimension_numbers<[1], [0], [0], [1], [0, 0, 1, 1], [], []>} : vector<64x19xbf16>, vector<19x128xbf16>, vector<64x128xf32> -> vector<64x128xf32>
    %43 = arith.addf %40, %42 : vector<64x128xf32>
    %c2 = arith.constant 2 : index
    %c0_19 = arith.constant 0 : index
    %44 = vector.load %arg4[%c2, %c0_19] : memref<8x640xf32, #tpu.memory_space<vmem>>, vector<1x128xf32>
    %45 = vector.broadcast %44 : vector<1x128xf32> to vector<64x128xf32>
    %46 = arith.addf %43, %45 : vector<64x128xf32>
    %c3 = arith.constant 3 : index
    %c0_20 = arith.constant 0 : index
    %47 = vector.load %arg4[%c3, %c0_20] : memref<8x640xf32, #tpu.memory_space<vmem>>, vector<1x128xf32>
    %c4 = arith.constant 4 : index
    %c0_21 = arith.constant 0 : index
    %48 = vector.load %arg4[%c4, %c0_21] : memref<8x640xf32, #tpu.memory_space<vmem>>, vector<1x128xf32>
    %cst_22 = arith.constant dense<0.000000e+00> : vector<128xf32>
    %49 = vector.multi_reduction <add>, %46, %cst_22 [0] : vector<64x128xf32> to vector<128xf32>
    %50 = vector.shape_cast %49 : vector<128xf32> to vector<1x128xf32>
    %cst_23 = arith.constant 6.400000e+01 : f32
    %51 = vector.broadcast %cst_23 : f32 to vector<1x128xf32>
    %52 = arith.divf %50, %51 : vector<1x128xf32>
    %53 = arith.mulf %46, %46 : vector<64x128xf32>
    %cst_24 = arith.constant dense<0.000000e+00> : vector<128xf32>
    %54 = vector.multi_reduction <add>, %53, %cst_24 [0] : vector<64x128xf32> to vector<128xf32>
    %55 = vector.shape_cast %54 : vector<128xf32> to vector<1x128xf32>
    %cst_25 = arith.constant 6.400000e+01 : f32
    %56 = vector.broadcast %cst_25 : f32 to vector<1x128xf32>
    %57 = arith.divf %55, %56 : vector<1x128xf32>
    %58 = arith.mulf %52, %52 : vector<1x128xf32>
    %59 = arith.subf %57, %58 : vector<1x128xf32>
    %cst_26 = arith.constant 0.000000e+00 : f32
    %60 = vector.broadcast %cst_26 : f32 to vector<1x128xf32>
    %61 = arith.maximumf %59, %60 : vector<1x128xf32>
    %62 = vector.broadcast %52 : vector<1x128xf32> to vector<64x128xf32>
    %63 = arith.subf %46, %62 : vector<64x128xf32>
    %cst_27 = arith.constant 9.99999974E-6 : f32
    %64 = vector.broadcast %cst_27 : f32 to vector<1x128xf32>
    %65 = arith.addf %61, %64 : vector<1x128xf32>
    %66 = math.rsqrt %65 : vector<1x128xf32>
    %67 = vector.broadcast %66 : vector<1x128xf32> to vector<64x128xf32>
    %68 = arith.mulf %63, %67 : vector<64x128xf32>
    %69 = vector.broadcast %47 : vector<1x128xf32> to vector<64x128xf32>
    %70 = arith.mulf %69, %68 : vector<64x128xf32>
    %71 = vector.broadcast %48 : vector<1x128xf32> to vector<64x128xf32>
    %72 = arith.addf %70, %71 : vector<64x128xf32>
    %cst_28 = arith.constant 0.000000e+00 : f32
    %73 = vector.broadcast %cst_28 : f32 to vector<64x128xf32>
    %74 = arith.cmpf ogt, %72, %73 : vector<64x128xf32>
    %cst_29 = arith.constant 0.00999999977 : f32
    %75 = vector.broadcast %cst_29 : f32 to vector<64x128xf32>
    %76 = arith.mulf %75, %72 : vector<64x128xf32>
    %77 = arith.select %74, %72, %76 : vector<64x128xi1>, vector<64x128xf32>
    %c0_30 = arith.constant 0 : index
    %c0_31 = arith.constant 0 : index
    %78 = vector.load %arg5[%c0_30, %c0_31] : memref<64x128xf32, #tpu.memory_space<vmem>>, vector<64x128xf32>
    tpu.vector_store %arg5[%c0_30, %c0_31], %77 {strides = array<i32>} : memref<64x128xf32, #tpu.memory_space<vmem>>, vector<64x128xf32>,
    return
  }
}

</mosaic_0001>

<llo_original>
// kernel: critic_encoder_forward.1
$region0: #{critic_encoder_forward.1}
  #allocation0 [shape = 'u32[]', space=smem, size = 0x4, offset = 0x4, fixed_abs, tag = 'smem constant byte address 0x4 - core index']
  #allocation1 [shape = 'u32[72,128]{1,0:T(1,128)}', space=vmem, size = 0x9000, scoped, tag = 'internal scratch']
  %s0 = inlined_call_operand.vmem [shape: f32[64,125], index: 0, kind: input, shape index: {}]
  %s1 = inlined_call_operand.vmem [shape: f32[64,19], index: 1, kind: input, shape index: {}]
  %s2 = inlined_call_operand.hbm [shape: bf16[128,640], index: 2, kind: input, shape index: {}]
  %s3 = inlined_call_operand.hbm [shape: bf16[560,128], index: 3, kind: input, shape index: {}]
  %s4 = inlined_call_operand.hbm [shape: f32[8,640], index: 4, kind: input, shape index: {}]
  %s5 = inlined_call_operand.hbm [shape: f32[64,128], index: 5, kind: output, shape index: {}]
  %s6 = sld [smem:[#allocation0]]
  $region42: #{critic_encoder_forward.1} parent=0
    _
  %s8 = ssub.s32 1, %s6
  %s9 = scalar_select 0, %s8, %s6
  $region1: #{critic_encoder_forward.1} parent=0
    #allocation2 [shape = 'u8[163840]{0}', space=vmem, size = 0x28000, scoped, tag = 'input window, operand 2, single buffered']
    #allocation3 [shape = 's32[1]{0}', space=sflag, size = 0x4, scoped, tag = 'scoped memory for critic_encoder_forward.1']
    #allocation4 [shape = 's32[1]{0}', space=sflag, size = 0x4, scoped, tag = 'scoped memory for critic_encoder_forward.1']
    #allocation5 [shape = 'u8[143360]{0}', space=vmem, size = 0x23000, scoped, tag = 'input window, operand 3, single buffered']
    #allocation6 [shape = 's32[1]{0}', space=sflag, size = 0x4, scoped, tag = 'scoped memory for critic_encoder_forward.1']
    #allocation7 [shape = 'u8[20480]{0}', space=vmem, size = 0x5000, scoped, tag = 'input window, operand 4, single buffered']
    #allocation8 [shape = 'u8[32768]{0}', space=vmem, size = 0x8000, scoped, tag = 'output window, operand 0, single buffered']
    %10 = vsyncpa [#allocation3], 0
    %11 = vsyncpa [#allocation6], 0
    %12 = vsyncpa [#allocation4], 0
    // Predicated region
    $region2: #{critic_encoder_forward.1} parent=1 // pred_check
      _
    $region3: #{critic_encoder_forward.1} parent=1 // pred_check_branch
      %14 = sbr.rel (0) target = $region5
    $region4: #{critic_encoder_forward.1} parent=1 // pred_region
      _
    $region5: #{critic_encoder_forward.1} parent=1 // pred_fallthru
      _
    // Predicated region
    $region6: #{critic_encoder_forward.1} parent=1 // pred_check
      _
    $region7: #{critic_encoder_forward.1} parent=1 // pred_check_branch
      %16 = sbr.rel (0) target = $region9
    $region8: #{critic_encoder_forward.1} parent=1 // pred_region
      _
    $region9: #{critic_encoder_forward.1} parent=1 // pred_fallthru
      _
    // Predicated region
    $region10: #{critic_encoder_forward.1} parent=1 // pred_check
      _
    $region11: #{critic_encoder_forward.1} parent=1 // pred_check_branch
      %18 = sbr.rel (0) target = $region13
    $region12: #{critic_encoder_forward.1} parent=1 // pred_region
      %20 = vsyncadd [#allocation3], 0
      %s21 = sshll.u32 %s2, 4
      %s22 = int_to_ptr.hbm [resolvable:$true] %s21
      %s23 = sshll.u32 [#allocation2], 4
      %s24 = int_to_ptr.vmem [resolvable:$true] %s23
      %29 = dma.hbm_to_vmem [thread:$0]  %s22, 5120, %s24, [#allocation3], 320, 320, 20
    $region13: #{critic_encoder_forward.1} parent=1 // pred_fallthru
      _
    // Predicated region
    $region14: #{critic_encoder_forward.1} parent=1 // pred_check
      _
    $region15: #{critic_encoder_forward.1} parent=1 // pred_check_branch
      %31 = sbr.rel (0) target = $region17
    $region16: #{critic_encoder_forward.1} parent=1 // pred_region
      %33 = vsyncadd [#allocation6], 0
      %s34 = sshll.u32 %s3, 4
      %s35 = int_to_ptr.hbm [resolvable:$true] %s34
      %s36 = sshll.u32 [#allocation5], 4
      %s37 = int_to_ptr.vmem [resolvable:$true] %s36
      %42 = dma.hbm_to_vmem [thread:$0]  %s35, 4480, %s37, [#allocation6], 64, 64, 4
    $region17: #{critic_encoder_forward.1} parent=1 // pred_fallthru
      _
    // Predicated region
    $region18: #{critic_encoder_forward.1} parent=1 // pred_check
      _
    $region19: #{critic_encoder_forward.1} parent=1 // pred_check_branch
      %44 = sbr.rel (0) target = $region21
    $region20: #{critic_encoder_forward.1} parent=1 // pred_region
      %46 = vsyncadd [#allocation6], 0
      %s48 = sshll.u32 %s4, 4
      %s49 = int_to_ptr.hbm [resolvable:$true] %s48
      %s50 = sshll.u32 [#allocation7], 4
      %s51 = int_to_ptr.vmem [resolvable:$true] %s50
      %53 = dma.hbm_to_vmem [thread:$0]  %s49, 640, %s51, [#allocation6]
    $region21: #{critic_encoder_forward.1} parent=1 // pred_fallthru
      _
    // Predicated region
    $region22: #{critic_encoder_forward.1} parent=1 // pred_check
      _
    $region23: #{critic_encoder_forward.1} parent=1 // pred_check_branch
      %55 = sbr.rel (0) target = $region25
    $region24: #{critic_encoder_forward.1} parent=1 // pred_region
      %57 = dma.done [#allocation3], 5120
    $region25: #{critic_encoder_forward.1} parent=1 // pred_fallthru
      _
    // Predicated region
    $region26: #{critic_encoder_forward.1} parent=1 // pred_check
      _
    $region27: #{critic_encoder_forward.1} parent=1 // pred_check_branch
      %59 = sbr.rel (0) target = $region29
    $region28: #{critic_encoder_forward.1} parent=1 // pred_region
      %61 = dma.done [#allocation6], 4480
    $region29: #{critic_encoder_forward.1} parent=1 // pred_fallthru
      _
    // Predicated region
    $region30: #{critic_encoder_forward.1} parent=1 // pred_check
      _
    $region31: #{critic_encoder_forward.1} parent=1 // pred_check_branch
      %63 = sbr.rel (0) target = $region33
    $region32: #{critic_encoder_forward.1} parent=1 // pred_region
      %65 = dma.done [#allocation6], 640
    $region33: #{critic_encoder_forward.1} parent=1 // pred_fallthru
      _
    %v67 = vld [vmem:[%s0] sm:$0xff]
    %v68 = vld [vmem:[%s0 + $0x8] sm:$0xff]
    %v69 = vld [vmem:[%s0 + $0x10] sm:$0xff]
    %v70 = vld [vmem:[%s0 + $0x18] sm:$0xff]
    %v71 = vld [vmem:[%s0 + $0x20] sm:$0xff]
    %v72 = vld [vmem:[%s0 + $0x28] sm:$0xff]
    %v73 = vld [vmem:[%s0 + $0x30] sm:$0xff]
    %v74 = vld [vmem:[%s0 + $0x38] sm:$0xff]
    %v75 = vpack.c.bf16 %v68, %v67
    %v76 = vpack.c.bf16 %v70, %v69
    %v77 = vpack.c.bf16 %v72, %v71
    %v78 = vpack.c.bf16 %v74, %v73
    %v79 = vld [vmem:[%s1] sm:$0xff]
    %v80 = vld [vmem:[%s1 + $0x8] sm:$0xff]
    %v81 = vld [vmem:[%s1 + $0x10] sm:$0xff]
    %v82 = vld [vmem:[%s1 + $0x18] sm:$0xff]
    %v83 = vld [vmem:[%s1 + $0x20] sm:$0xff]
    %v84 = vld [vmem:[%s1 + $0x28] sm:$0xff]
    %v85 = vld [vmem:[%s1 + $0x30] sm:$0xff]
    %v86 = vld [vmem:[%s1 + $0x38] sm:$0xff]
    %v87 = vpack.c.bf16 %v80, %v79
    %v88 = vpack.c.bf16 %v82, %v81
    %v89 = vpack.c.bf16 %v84, %v83
    %v90 = vpack.c.bf16 %v86, %v85
    %v91 = vld [vmem:[#allocation2] sm:$0xff]
    %v92 = vld [vmem:[#allocation2 + $0x8] sm:$0xff]
    %v93 = vld [vmem:[#allocation2 + $0x10] sm:$0xf]
    %v94 = vld [vmem:[#allocation2 + $0x14] sm:$0xff]
    %v95 = vld [vmem:[#allocation2 + $0x1c] sm:$0xff]
    %v96 = vld [vmem:[#allocation2 + $0x24] sm:$0xf]
    %v97 = vld [vmem:[#allocation2 + $0x28] sm:$0xff]
    %v98 = vld [vmem:[#allocation2 + $0x30] sm:$0xff]
    %v99 = vld [vmem:[#allocation2 + $0x38] sm:$0xf]
    %v100 = vld [vmem:[#allocation2 + $0x3c] sm:$0xff]
    %v101 = vld [vmem:[#allocation2 + $0x44] sm:$0xff]
    %v102 = vld [vmem:[#allocation2 + $0x4c] sm:$0xf]
    %v103 = vld [vmem:[#allocation2 + $0x50] sm:$0xff]
    %v104 = vld [vmem:[#allocation2 + $0x58] sm:$0xff]
    %v105 = vld [vmem:[#allocation2 + $0x60] sm:$0xf]
    %v106 = vld [vmem:[#allocation2 + $0x64] sm:$0xff]
    %v107 = vld [vmem:[#allocation2 + $0x6c] sm:$0xff]
    %v108 = vld [vmem:[#allocation2 + $0x74] sm:$0xf]
    %v109 = vld [vmem:[#allocation2 + $0x78] sm:$0xff]
    %v110 = vld [vmem:[#allocation2 + $0x80] sm:$0xff]
    %v111 = vld [vmem:[#allocation2 + $0x88] sm:$0xf]
    %v112 = vld [vmem:[#allocation2 + $0x8c] sm:$0xff]
    %v113 = vld [vmem:[#allocation2 + $0x94] sm:$0xff]
    %v114 = vld [vmem:[#allocation2 + $0x9c] sm:$0xf]
    %v115 = vld [vmem:[#allocation2 + $0xa0] sm:$0xff]
    %v116 = vld [vmem:[#allocation2 + $0xa8] sm:$0xff]
    %v117 = vld [vmem:[#allocation2 + $0xb0] sm:$0xf]
    %v118 = vld [vmem:[#allocation2 + $0xb4] sm:$0xff]
    %v119 = vld [vmem:[#allocation2 + $0xbc] sm:$0xff]
    %v120 = vld [vmem:[#allocation2 + $0xc4] sm:$0xf]
    %v121 = vld [vmem:[#allocation2 + $0xc8] sm:$0xff]
    %v122 = vld [vmem:[#allocation2 + $0xd0] sm:$0xff]
    %v123 = vld [vmem:[#allocation2 + $0xd8] sm:$0xf]
    %v124 = vld [vmem:[#allocation2 + $0xdc] sm:$0xff]
    %v125 = vld [vmem:[#allocation2 + $0xe4] sm:$0xff]
    %v126 = vld [vmem:[#allocation2 + $0xec] sm:$0xf]
    %v127 = vld [vmem:[#allocation2 + $0xf0] sm:$0xff]
    %v128 = vld [vmem:[#allocation2 + $0xf8] sm:$0xff]
    %v129 = vld [vmem:[#allocation2 + $0x100] sm:$0xf]
    %v130 = vld [vmem:[#allocation2 + $0x104] sm:$0xff]
    %v131 = vld [vmem:[#allocation2 + $0x10c] sm:$0xff]
    %v132 = vld [vmem:[#allocation2 + $0x114] sm:$0xf]
    %v133 = vld [vmem:[#allocation2 + $0x118] sm:$0xff]
    %v134 = vld [vmem:[#allocation2 + $0x120] sm:$0xff]
    %v135 = vld [vmem:[#allocation2 + $0x128] sm:$0xf]
    %v136 = vld [vmem:[#allocation2 + $0x12c] sm:$0x77]
    %v137 = vld [vmem:[#allocation2 + $0x134] sm:$0x77]
    %v138 = vld [vmem:[#allocation2 + $0x13c] sm:$0x7]
    %v139 = vld [vmem:[#allocation7] ss:$8 sm:$0xf]
    %v140 = vld [vmem:[#allocation7] ss:$8 sm:$0x10]
    %v141 = vor.u32 %v139, %v140
    %v143 = vperm.slane %v141, 0
    %v144 = vperm.slane %v141, 1
    %v145 = vperm.slane %v141, 2
    %v146 = vperm.slane %v141, 3
    %v147 = vperm.slane %v141, 4
    %v201 = vunpack.c.l.b16 %v91
    %v202 = vunpack.c.h.b16 %v91
    %v203 = vunpack.c.l.b16 %v92
    %v204 = vunpack.c.h.b16 %v92
    %v205 = vunpack.c.l.b16 %v93
    %v206 = vunpack.c.l.b16 %v94
    %v207 = vunpack.c.h.b16 %v94
    %v208 = vunpack.c.l.b16 %v95
    %v209 = vunpack.c.h.b16 %v95
    %v210 = vunpack.c.l.b16 %v96
    %v211 = vunpack.c.l.b16 %v97
    %v212 = vunpack.c.h.b16 %v97
    %v213 = vunpack.c.l.b16 %v98
    %v214 = vunpack.c.h.b16 %v98
    %v215 = vunpack.c.l.b16 %v99
    %v216 = vunpack.c.l.b16 %v100
    %v217 = vunpack.c.h.b16 %v100
    %v218 = vunpack.c.l.b16 %v101
    %v219 = vunpack.c.h.b16 %v101
    %v220 = vunpack.c.l.b16 %v102
    %v221 = vunpack.c.l.b16 %v103
    %v222 = vunpack.c.h.b16 %v103
    %v223 = vunpack.c.l.b16 %v104
    %v224 = vunpack.c.h.b16 %v104
    %v225 = vunpack.c.l.b16 %v105
    %v226 = vunpack.c.l.b16 %v106
    %v227 = vunpack.c.h.b16 %v106
    %v228 = vunpack.c.l.b16 %v107
    %v229 = vunpack.c.h.b16 %v107
    %v230 = vunpack.c.l.b16 %v108
    %v231 = vunpack.c.l.b16 %v109
    %v232 = vunpack.c.h.b16 %v109
    %v233 = vunpack.c.l.b16 %v110
    %v234 = vunpack.c.h.b16 %v110
    %v235 = vunpack.c.l.b16 %v111
    %v236 = vunpack.c.l.b16 %v112
    %v237 = vunpack.c.h.b16 %v112
    %v238 = vunpack.c.l.b16 %v113
    %v239 = vunpack.c.h.b16 %v113
    %v240 = vunpack.c.l.b16 %v114
    %v241 = vunpack.c.l.b16 %v115
    %v242 = vunpack.c.h.b16 %v115
    %v243 = vunpack.c.l.b16 %v116
    %v244 = vunpack.c.h.b16 %v116
    %v245 = vunpack.c.l.b16 %v117
    %v246 = vunpack.c.l.b16 %v118
    %v247 = vunpack.c.h.b16 %v118
    %v248 = vunpack.c.l.b16 %v119
    %v249 = vunpack.c.h.b16 %v119
    %v250 = vunpack.c.l.b16 %v120
    %v251 = vunpack.c.l.b16 %v121
    %v252 = vunpack.c.h.b16 %v121
    %v253 = vunpack.c.l.b16 %v122
    %v254 = vunpack.c.h.b16 %v122
    %v255 = vunpack.c.l.b16 %v123
    %v256 = vunpack.c.l.b16 %v124
    %v257 = vunpack.c.h.b16 %v124
    %v258 = vunpack.c.l.b16 %v125
    %v259 = vunpack.c.h.b16 %v125
    %v260 = vunpack.c.l.b16 %v126
    %v261 = vunpack.c.l.b16 %v127
    %v262 = vunpack.c.h.b16 %v127
    %v263 = vunpack.c.l.b16 %v128
    %v264 = vunpack.c.h.b16 %v128
    %v265 = vunpack.c.l.b16 %v129
    %v266 = vunpack.c.l.b16 %v130
    %v267 = vunpack.c.h.b16 %v130
    %v268 = vunpack.c.l.b16 %v131
    %v269 = vunpack.c.h.b16 %v131
    %v270 = vunpack.c.l.b16 %v132
    %v271 = vunpack.c.l.b16 %v133
    %v272 = vunpack.c.h.b16 %v133
    %v273 = vunpack.c.l.b16 %v134
    %v274 = vunpack.c.h.b16 %v134
    %v275 = vunpack.c.l.b16 %v135
    %v276 = vunpack.c.l.b16 %v136
    %v277 = vunpack.c.h.b16 %v136
    %v278 = vunpack.c.l.b16 %v137
    %v279 = vunpack.c.h.b16 %v137
    %v280 = vunpack.c.l.b16 %v138
    %v281 = vpack.c.b16 %v206, %v201
    %v282 = vpack.c.b16 %v207, %v202
    %v283 = vpack.c.b16 %v208, %v203
    %v284 = vpack.c.b16 %v209, %v204
    %v285 = vpack.c.b16 %v210, %v205
    %v286 = vpack.c.b16 %v216, %v211
    %v287 = vpack.c.b16 %v217, %v212
    %v288 = vpack.c.b16 %v218, %v213
    %v289 = vpack.c.b16 %v219, %v214
    %v290 = vpack.c.b16 %v220, %v215
    %v291 = vpack.c.b16 %v226, %v221
    %v292 = vpack.c.b16 %v227, %v222
    %v293 = vpack.c.b16 %v228, %v223
    %v294 = vpack.c.b16 %v229, %v224
    %v295 = vpack.c.b16 %v230, %v225
    %v296 = vpack.c.b16 %v236, %v231
    %v297 = vpack.c.b16 %v237, %v232
    %v298 = vpack.c.b16 %v238, %v233
    %v299 = vpack.c.b16 %v239, %v234
    %v300 = vpack.c.b16 %v240, %v235
    %v301 = vpack.c.b16 %v246, %v241
    %v302 = vpack.c.b16 %v247, %v242
    %v303 = vpack.c.b16 %v248, %v243
    %v304 = vpack.c.b16 %v249, %v244
    %v305 = vpack.c.b16 %v250, %v245
    %v306 = vpack.c.b16 %v256, %v251
    %v307 = vpack.c.b16 %v257, %v252
    %v308 = vpack.c.b16 %v258, %v253
    %v309 = vpack.c.b16 %v259, %v254
    %v310 = vpack.c.b16 %v260, %v255
    %v311 = vpack.c.b16 %v266, %v261
    %v312 = vpack.c.b16 %v267, %v262
    %v313 = vpack.c.b16 %v268, %v263
    %v314 = vpack.c.b16 %v269, %v264
    %v315 = vpack.c.b16 %v270, %v265
    %v316 = vpack.c.b16 %v276, %v271
    %v317 = vpack.c.b16 %v277, %v272
    %v318 = vpack.c.b16 %v278, %v273
    %v319 = vpack.c.b16 %v279, %v274
    %v320 = vpack.c.b16 %v280, %v275
    %vm356 = vcmask 1022976
    %v358 = vsel %vm356, %v75, 0
    %v361 = vsel %vm356, %v76, 0
    %v364 = vsel %vm356, %v77, 0
    %v367 = vsel %vm356, %v78, 0
    %vm369 = vcmask 1045504
    %vm370 = vcmask 1046528
    %v371 = vsel %vm369, 4294967295, 65535
    %v372 = vsel %vm370, %v371, 0
    %v374 = vand.u32 %v316, %v372
    %v377 = vand.u32 %v317, %v372
    %v380 = vand.u32 %v318, %v372
    %v383 = vand.u32 %v319, %v372
    %v386 = vand.u32 %v320, %v372
    %388 = vmatpush.bf16.msra.mxu0 %v374
    %389 = vmatpush.bf16.msra.mxu0 %v311
    %390 = vmatpush.bf16.msra.mxu0 %v306
    %391 = vmatpush.bf16.msra.mxu0 %v301
    %392 = vmatpush.bf16.msra.mxu0 %v296
    %393 = vmatpush.bf16.msra.mxu0 %v291
    %394 = vmatpush.bf16.msra.mxu0 %v286
    %395 = vmatpush.bf16.msra.mxu0 %v281
    %396 = vmatmul.bf16.gmra.mxu0 %v358
    %v397 = vpop.f32.mrf.mxu0
    %v398 = vadd.f32 %v143, %v397
    %v399 = vpop.f32.mrf.mxu0
    %v400 = vadd.f32 %v143, %v399
    %401 = vmatmul.bf16.gmra.mxu0 %v361
    %v402 = vpop.f32.mrf.mxu0
    %v403 = vadd.f32 %v143, %v402
    %v404 = vpop.f32.mrf.mxu0
    %v405 = vadd.f32 %v143, %v404
    %406 = vmatmul.bf16.gmra.mxu0 %v364
    %v407 = vpop.f32.mrf.mxu0
    %v408 = vadd.f32 %v143, %v407
    %v409 = vpop.f32.mrf.mxu0
    %v410 = vadd.f32 %v143, %v409
    %411 = vmatmul.bf16.gmra.mxu0 %v367
    %v412 = vpop.f32.mrf.mxu0
    %v413 = vadd.f32 %v143, %v412
    %v414 = vpop.f32.mrf.mxu0
    %v415 = vadd.f32 %v143, %v414
    %416 = vdwg.mxu0
    %417 = vmatpush.bf16.msra.mxu0 %v377
    %418 = vmatpush.bf16.msra.mxu0 %v312
    %419 = vmatpush.bf16.msra.mxu0 %v307
    %420 = vmatpush.bf16.msra.mxu0 %v302
    %421 = vmatpush.bf16.msra.mxu0 %v297
    %422 = vmatpush.bf16.msra.mxu0 %v292
    %423 = vmatpush.bf16.msra.mxu0 %v287
    %424 = vmatpush.bf16.msra.mxu0 %v282
    %425 = vmatmul.bf16.gmra.mxu0 %v358
    %v426 = vpop.f32.mrf.mxu0
    %v427 = vadd.f32 %v144, %v426
    %v428 = vpop.f32.mrf.mxu0
    %v429 = vadd.f32 %v144, %v428
    %430 = vmatmul.bf16.gmra.mxu0 %v361
    %v431 = vpop.f32.mrf.mxu0
    %v432 = vadd.f32 %v144, %v431
    %v433 = vpop.f32.mrf.mxu0
    %v434 = vadd.f32 %v144, %v433
    %435 = vmatmul.bf16.gmra.mxu0 %v364
    %v436 = vpop.f32.mrf.mxu0
    %v437 = vadd.f32 %v144, %v436
    %v438 = vpop.f32.mrf.mxu0
    %v439 = vadd.f32 %v144, %v438
    %440 = vmatmul.bf16.gmra.mxu0 %v367
    %v441 = vpop.f32.mrf.mxu0
    %v442 = vadd.f32 %v144, %v441
    %v443 = vpop.f32.mrf.mxu0
    %v444 = vadd.f32 %v144, %v443
    %445 = vdwg.mxu0
    %446 = vmatpush.bf16.msra.mxu0 %v380
    %447 = vmatpush.bf16.msra.mxu0 %v313
    %448 = vmatpush.bf16.msra.mxu0 %v308
    %449 = vmatpush.bf16.msra.mxu0 %v303
    %450 = vmatpush.bf16.msra.mxu0 %v298
    %451 = vmatpush.bf16.msra.mxu0 %v293
    %452 = vmatpush.bf16.msra.mxu0 %v288
    %453 = vmatpush.bf16.msra.mxu0 %v283
    %454 = vmatmul.bf16.gmra.mxu0 %v358
    %v455 = vpop.f32.mrf.mxu0
    %v456 = vadd.f32 %v145, %v455
    %v457 = vpop.f32.mrf.mxu0
    %v458 = vadd.f32 %v145, %v457
    %459 = vmatmul.bf16.gmra.mxu0 %v361
    %v460 = vpop.f32.mrf.mxu0
    %v461 = vadd.f32 %v145, %v460
    %v462 = vpop.f32.mrf.mxu0
    %v463 = vadd.f32 %v145, %v462
    %464 = vmatmul.bf16.gmra.mxu0 %v364
    %v465 = vpop.f32.mrf.mxu0
    %v466 = vadd.f32 %v145, %v465
    %v467 = vpop.f32.mrf.mxu0
    %v468 = vadd.f32 %v145, %v467
    %469 = vmatmul.bf16.gmra.mxu0 %v367
    %v470 = vpop.f32.mrf.mxu0
    %v471 = vadd.f32 %v145, %v470
    %v472 = vpop.f32.mrf.mxu0
    %v473 = vadd.f32 %v145, %v472
    %474 = vdwg.mxu0
    %475 = vmatpush.bf16.msra.mxu0 %v383
    %476 = vmatpush.bf16.msra.mxu0 %v314
    %477 = vmatpush.bf16.msra.mxu0 %v309
    %478 = vmatpush.bf16.msra.mxu0 %v304
    %479 = vmatpush.bf16.msra.mxu0 %v299
    %480 = vmatpush.bf16.msra.mxu0 %v294
    %481 = vmatpush.bf16.msra.mxu0 %v289
    %482 = vmatpush.bf16.msra.mxu0 %v284
    %483 = vmatmul.bf16.gmra.mxu0 %v358
    %v484 = vpop.f32.mrf.mxu0
    %v485 = vadd.f32 %v146, %v484
    %v486 = vpop.f32.mrf.mxu0
    %v487 = vadd.f32 %v146, %v486
    %488 = vmatmul.bf16.gmra.mxu0 %v361
    %v489 = vpop.f32.mrf.mxu0
    %v490 = vadd.f32 %v146, %v489
    %v491 = vpop.f32.mrf.mxu0
    %v492 = vadd.f32 %v146, %v491
    %493 = vmatmul.bf16.gmra.mxu0 %v364
    %v494 = vpop.f32.mrf.mxu0
    %v495 = vadd.f32 %v146, %v494
    %v496 = vpop.f32.mrf.mxu0
    %v497 = vadd.f32 %v146, %v496
    %498 = vmatmul.bf16.gmra.mxu0 %v367
    %v499 = vpop.f32.mrf.mxu0
    %v500 = vadd.f32 %v146, %v499
    %v501 = vpop.f32.mrf.mxu0
    %v502 = vadd.f32 %v146, %v501
    %503 = vdwg.mxu0
    %504 = vmatpush.bf16.msra.mxu0 %v386
    %505 = vmatpush.bf16.msra.mxu0 %v315
    %506 = vmatpush.bf16.msra.mxu0 %v310
    %507 = vmatpush.bf16.msra.mxu0 %v305
    %508 = vmatpush.bf16.msra.mxu0 %v300
    %509 = vmatpush.bf16.msra.mxu0 %v295
    %510 = vmatpush.bf16.msra.mxu0 %v290
    %511 = vmatpush.bf16.msra.mxu0 %v285
    %512 = vmatmul.bf16.gmra.mxu0 %v358
    %v513 = vpop.f32.mrf.mxu0
    %v514 = vadd.f32 %v147, %v513
    %v515 = vpop.f32.mrf.mxu0
    %v516 = vadd.f32 %v147, %v515
    %517 = vmatmul.bf16.gmra.mxu0 %v361
    %v518 = vpop.f32.mrf.mxu0
    %v519 = vadd.f32 %v147, %v518
    %v520 = vpop.f32.mrf.mxu0
    %v521 = vadd.f32 %v147, %v520
    %522 = vmatmul.bf16.gmra.mxu0 %v364
    %v523 = vpop.f32.mrf.mxu0
    %v524 = vadd.f32 %v147, %v523
    %v525 = vpop.f32.mrf.mxu0
    %v526 = vadd.f32 %v147, %v525
    %527 = vmatmul.bf16.gmra.mxu0 %v367
    %v528 = vpop.f32.mrf.mxu0
    %v529 = vadd.f32 %v147, %v528
    %v530 = vpop.f32.mrf.mxu0
    %v531 = vadd.f32 %v147, %v530
    %532 = vdwg.mxu0
    %vm533 = vcmp.gt.f32.partialorder %v398, 0.0
    %vm534 = vcmp.gt.f32.partialorder %v427, 0.0
    %vm535 = vcmp.gt.f32.partialorder %v456, 0.0
    %vm536 = vcmp.gt.f32.partialorder %v485, 0.0
    %vm537 = vcmp.gt.f32.partialorder %v514, 0.0
    %vm538 = vcmp.gt.f32.partialorder %v400, 0.0
    %vm539 = vcmp.gt.f32.partialorder %v429, 0.0
    %vm540 = vcmp.gt.f32.partialorder %v458, 0.0
    %vm541 = vcmp.gt.f32.partialorder %v487, 0.0
    %vm542 = vcmp.gt.f32.partialorder %v516, 0.0
    %vm543 = vcmp.gt.f32.partialorder %v403, 0.0
    %vm544 = vcmp.gt.f32.partialorder %v432, 0.0
    %vm545 = vcmp.gt.f32.partialorder %v461, 0.0
    %vm546 = vcmp.gt.f32.partialorder %v490, 0.0
    %vm547 = vcmp.gt.f32.partialorder %v519, 0.0
    %vm548 = vcmp.gt.f32.partialorder %v405, 0.0
    %vm549 = vcmp.gt.f32.partialorder %v434, 0.0
    %vm550 = vcmp.gt.f32.partialorder %v463, 0.0
    %vm551 = vcmp.gt.f32.partialorder %v492, 0.0
    %vm552 = vcmp.gt.f32.partialorder %v521, 0.0
    %vm553 = vcmp.gt.f32.partialorder %v408, 0.0
    %vm554 = vcmp.gt.f32.partialorder %v437, 0.0
    %vm555 = vcmp.gt.f32.partialorder %v466, 0.0
    %vm556 = vcmp.gt.f32.partialorder %v495, 0.0
    %vm557 = vcmp.gt.f32.partialorder %v524, 0.0
    %vm558 = vcmp.gt.f32.partialorder %v410, 0.0
    %vm559 = vcmp.gt.f32.partialorder %v439, 0.0
    %vm560 = vcmp.gt.f32.partialorder %v468, 0.0
    %vm561 = vcmp.gt.f32.partialorder %v497, 0.0
    %vm562 = vcmp.gt.f32.partialorder %v526, 0.0
    %vm563 = vcmp.gt.f32.partialorder %v413, 0.0
    %vm564 = vcmp.gt.f32.partialorder %v442, 0.0
    %vm565 = vcmp.gt.f32.partialorder %v471, 0.0
    %vm566 = vcmp.gt.f32.partialorder %v500, 0.0
    %vm567 = vcmp.gt.f32.partialorder %v529, 0.0
    %vm568 = vcmp.gt.f32.partialorder %v415, 0.0
    %vm569 = vcmp.gt.f32.partialorder %v444, 0.0
    %vm570 = vcmp.gt.f32.partialorder %v473, 0.0
    %vm571 = vcmp.gt.f32.partialorder %v502, 0.0
    %vm572 = vcmp.gt.f32.partialorder %v531, 0.0
    %v573 = vmul.f32 %v398, 0.2
    %v574 = vmul.f32 %v427, 0.2
    %v575 = vmul.f32 %v456, 0.2
    %v576 = vmul.f32 %v485, 0.2
    %v577 = vmul.f32 %v514, 0.2
    %v578 = vmul.f32 %v400, 0.2
    %v579 = vmul.f32 %v429, 0.2
    %v580 = vmul.f32 %v458, 0.2
    %v581 = vmul.f32 %v487, 0.2
    %v582 = vmul.f32 %v516, 0.2
    %v583 = vmul.f32 %v403, 0.2
    %v584 = vmul.f32 %v432, 0.2
    %v585 = vmul.f32 %v461, 0.2
    %v586 = vmul.f32 %v490, 0.2
    %v587 = vmul.f32 %v519, 0.2
    %v588 = vmul.f32 %v405, 0.2
    %v589 = vmul.f32 %v434, 0.2
    %v590 = vmul.f32 %v463, 0.2
    %v591 = vmul.f32 %v492, 0.2
    %v592 = vmul.f32 %v521, 0.2
    %v593 = vmul.f32 %v408, 0.2
    %v594 = vmul.f32 %v437, 0.2
    %v595 = vmul.f32 %v466, 0.2
    %v596 = vmul.f32 %v495, 0.2
    %v597 = vmul.f32 %v524, 0.2
    %v598 = vmul.f32 %v410, 0.2
    %v599 = vmul.f32 %v439, 0.2
    %v600 = vmul.f32 %v468, 0.2
    %v601 = vmul.f32 %v497, 0.2
    %v602 = vmul.f32 %v526, 0.2
    %v603 = vmul.f32 %v413, 0.2
    %v604 = vmul.f32 %v442, 0.2
    %v605 = vmul.f32 %v471, 0.2
    %v606 = vmul.f32 %v500, 0.2
    %v607 = vmul.f32 %v529, 0.2
    %v608 = vmul.f32 %v415, 0.2
    %v609 = vmul.f32 %v444, 0.2
    %v610 = vmul.f32 %v473, 0.2
    %v611 = vmul.f32 %v502, 0.2
    %v612 = vmul.f32 %v531, 0.2
    %v613 = vsel %vm533, %v398, %v573
    %v614 = vsel %vm534, %v427, %v574
    %v615 = vsel %vm535, %v456, %v575
    %v616 = vsel %vm536, %v485, %v576
    %v617 = vsel %vm537, %v514, %v577
    %v618 = vsel %vm538, %v400, %v578
    %v619 = vsel %vm539, %v429, %v579
    %v620 = vsel %vm540, %v458, %v580
    %v621 = vsel %vm541, %v487, %v581
    %v622 = vsel %vm542, %v516, %v582
    %v623 = vsel %vm543, %v403, %v583
    %v624 = vsel %vm544, %v432, %v584
    %v625 = vsel %vm545, %v461, %v585
    %v626 = vsel %vm546, %v490, %v586
    %v627 = vsel %vm547, %v519, %v587
    %v628 = vsel %vm548, %v405, %v588
    %v629 = vsel %vm549, %v434, %v589
    %v630 = vsel %vm550, %v463, %v590
    %v631 = vsel %vm551, %v492, %v591
    %v632 = vsel %vm552, %v521, %v592
    %v633 = vsel %vm553, %v408, %v593
    %v634 = vsel %vm554, %v437, %v594
    %v635 = vsel %vm555, %v466, %v595
    %v636 = vsel %vm556, %v495, %v596
    %v637 = vsel %vm557, %v524, %v597
    %v638 = vsel %vm558, %v410, %v598
    %v639 = vsel %vm559, %v439, %v599
    %v640 = vsel %vm560, %v468, %v600
    %v641 = vsel %vm561, %v497, %v601
    %v642 = vsel %vm562, %v526, %v602
    %v643 = vsel %vm563, %v413, %v603
    %v644 = vsel %vm564, %v442, %v604
    %v645 = vsel %vm565, %v471, %v605
    %v646 = vsel %vm566, %v500, %v606
    %v647 = vsel %vm567, %v529, %v607
    %v648 = vsel %vm568, %v415, %v608
    %v649 = vsel %vm569, %v444, %v609
    %v650 = vsel %vm570, %v473, %v610
    %v651 = vsel %vm571, %v502, %v611
    %v652 = vsel %vm572, %v531, %v612
    %v653 = vmax.f32 %v613, %v614
    %v654 = vmax.f32 %v614, %v615
    %v655 = vmax.f32 %v615, %v616
    %v656 = vmax.f32 %v616, %v617
    %v657 = vmax.f32 %v618, %v619
    %v658 = vmax.f32 %v619, %v620
    %v659 = vmax.f32 %v620, %v621
    %v660 = vmax.f32 %v621, %v622
    %v661 = vmax.f32 %v623, %v624
    %v662 = vmax.f32 %v624, %v625
    %v663 = vmax.f32 %v625, %v626
    %v664 = vmax.f32 %v626, %v627
    %v665 = vmax.f32 %v628, %v629
    %v666 = vmax.f32 %v629, %v630
    %v667 = vmax.f32 %v630, %v631
    %v668 = vmax.f32 %v631, %v632
    %v669 = vmax.f32 %v633, %v634
    %v670 = vmax.f32 %v634, %v635
    %v671 = vmax.f32 %v635, %v636
    %v672 = vmax.f32 %v636, %v637
    %v673 = vmax.f32 %v638, %v639
    %v674 = vmax.f32 %v639, %v640
    %v675 = vmax.f32 %v640, %v641
    %v676 = vmax.f32 %v641, %v642
    %v677 = vmax.f32 %v643, %v644
    %v678 = vmax.f32 %v644, %v645
    %v679 = vmax.f32 %v645, %v646
    %v680 = vmax.f32 %v646, %v647
    %v681 = vmax.f32 %v648, %v649
    %v682 = vmax.f32 %v649, %v650
    %v683 = vmax.f32 %v650, %v651
    %v684 = vmax.f32 %v651, %v652
    %717 = vrot.lane.b32.xlu0 %v653, 108
    %v718 = vpop.permute.xlu0 %717
    %719 = vrot.lane.b32.xlu0 %v654, 108
    %v720 = vpop.permute.xlu0 %719
    %721 = vrot.lane.b32.xlu0 %v655, 108
    %v722 = vpop.permute.xlu0 %721
    %723 = vrot.lane.b32.xlu0 %v656, 108
    %v724 = vpop.permute.xlu0 %723
    %725 = vrot.lane.b32.xlu0 %v657, 108
    %v726 = vpop.permute.xlu0 %725
    %727 = vrot.lane.b32.xlu0 %v658, 108
    %v728 = vpop.permute.xlu0 %727
    %729 = vrot.lane.b32.xlu0 %v659, 108
    %v730 = vpop.permute.xlu0 %729
    %731 = vrot.lane.b32.xlu0 %v660, 108
    %v732 = vpop.permute.xlu0 %731
    %733 = vrot.lane.b32.xlu0 %v661, 108
    %v734 = vpop.permute.xlu0 %733
    %735 = vrot.lane.b32.xlu0 %v662, 108
    %v736 = vpop.permute.xlu0 %735
    %737 = vrot.lane.b32.xlu0 %v663, 108
    %v738 = vpop.permute.xlu0 %737
    %739 = vrot.lane.b32.xlu0 %v664, 108
    %v740 = vpop.permute.xlu0 %739
    %741 = vrot.lane.b32.xlu0 %v665, 108
    %v742 = vpop.permute.xlu0 %741
    %743 = vrot.lane.b32.xlu0 %v666, 108
    %v744 = vpop.permute.xlu0 %743
    %745 = vrot.lane.b32.xlu0 %v667, 108
    %v746 = vpop.permute.xlu0 %745
    %747 = vrot.lane.b32.xlu0 %v668, 108
    %v748 = vpop.permute.xlu0 %747
    %749 = vrot.lane.b32.xlu0 %v669, 108
    %v750 = vpop.permute.xlu0 %749
    %751 = vrot.lane.b32.xlu0 %v670, 108
    %v752 = vpop.permute.xlu0 %751
    %753 = vrot.lane.b32.xlu0 %v671, 108
    %v754 = vpop.permute.xlu0 %753
    %755 = vrot.lane.b32.xlu0 %v672, 108
    %v756 = vpop.permute.xlu0 %755
    %757 = vrot.lane.b32.xlu0 %v673, 108
    %v758 = vpop.permute.xlu0 %757
    %759 = vrot.lane.b32.xlu0 %v674, 108
    %v760 = vpop.permute.xlu0 %759
    %761 = vrot.lane.b32.xlu0 %v675, 108
    %v762 = vpop.permute.xlu0 %761
    %763 = vrot.lane.b32.xlu0 %v676, 108
    %v764 = vpop.permute.xlu0 %763
    %765 = vrot.lane.b32.xlu0 %v677, 108
    %v766 = vpop.permute.xlu0 %765
    %767 = vrot.lane.b32.xlu0 %v678, 108
    %v768 = vpop.permute.xlu0 %767
    %769 = vrot.lane.b32.xlu0 %v679, 108
    %v770 = vpop.permute.xlu0 %769
    %771 = vrot.lane.b32.xlu0 %v680, 108
    %v772 = vpop.permute.xlu0 %771
    %773 = vrot.lane.b32.xlu0 %v681, 108
    %v774 = vpop.permute.xlu0 %773
    %775 = vrot.lane.b32.xlu0 %v682, 108
    %v776 = vpop.permute.xlu0 %775
    %777 = vrot.lane.b32.xlu0 %v683, 108
    %v778 = vpop.permute.xlu0 %777
    %779 = vrot.lane.b32.xlu0 %v684, 108
    %v780 = vpop.permute.xlu0 %779
    %vm781 = vcmask 883712
    %v782 = vsel %vm781, %v718, %v720
    %v783 = vsel %vm781, %v720, %v722
    %v784 = vsel %vm781, %v722, %v724
    %v785 = vsel %vm781, %v726, %v728
    %v786 = vsel %vm781, %v728, %v730
    %v787 = vsel %vm781, %v730, %v732
    %v788 = vsel %vm781, %v734, %v736
    %v789 = vsel %vm781, %v736, %v738
    %v790 = vsel %vm781, %v738, %v740
    %v791 = vsel %vm781, %v742, %v744
    %v792 = vsel %vm781, %v744, %v746
    %v793 = vsel %vm781, %v746, %v748
    %v794 = vsel %vm781, %v750, %v752
    %v795 = vsel %vm781, %v752, %v754
    %v796 = vsel %vm781, %v754, %v756
    %v797 = vsel %vm781, %v758, %v760
    %v798 = vsel %vm781, %v760, %v762
    %v799 = vsel %vm781, %v762, %v764
    %v800 = vsel %vm781, %v766, %v768
    %v801 = vsel %vm781, %v768, %v770
    %v802 = vsel %vm781, %v770, %v772
    %v803 = vsel %vm781, %v774, %v776
    %v804 = vsel %vm781, %v776, %v778
    %v805 = vsel %vm781, %v778, %v780
    %v838 = vmax.f32 %v653, %v782
    %v839 = vmax.f32 %v654, %v783
    %v840 = vmax.f32 %v655, %v784
    %v841 = vmax.f32 %v656, %v724
    %v842 = vmax.f32 %v657, %v785
    %v843 = vmax.f32 %v658, %v786
    %v844 = vmax.f32 %v659, %v787
    %v845 = vmax.f32 %v660, %v732
    %v846 = vmax.f32 %v661, %v788
    %v847 = vmax.f32 %v662, %v789
    %v848 = vmax.f32 %v663, %v790
    %v849 = vmax.f32 %v664, %v740
    %v850 = vmax.f32 %v665, %v791
    %v851 = vmax.f32 %v666, %v792
    %v852 = vmax.f32 %v667, %v793
    %v853 = vmax.f32 %v668, %v748
    %v854 = vmax.f32 %v669, %v794
    %v855 = vmax.f32 %v670, %v795
    %v856 = vmax.f32 %v671, %v796
    %v857 = vmax.f32 %v672, %v756
    %v858 = vmax.f32 %v673, %v797
    %v859 = vmax.f32 %v674, %v798
    %v860 = vmax.f32 %v675, %v799
    %v861 = vmax.f32 %v676, %v764
    %v862 = vmax.f32 %v677, %v800
    %v863 = vmax.f32 %v678, %v801
    %v864 = vmax.f32 %v679, %v802
    %v865 = vmax.f32 %v680, %v772
    %v866 = vmax.f32 %v681, %v803
    %v867 = vmax.f32 %v682, %v804
    %v868 = vmax.f32 %v683, %v805
    %v869 = vmax.f32 %v684, %v780
    %v870 = vpack.c.bf16 %v842, %v838
    %v871 = vpack.c.bf16 %v843, %v839
    %v872 = vpack.c.bf16 %v844, %v840
    %v873 = vpack.c.bf16 %v845, %v841
    %v874 = vpack.c.bf16 %v850, %v846
    %v875 = vpack.c.bf16 %v851, %v847
    %v876 = vpack.c.bf16 %v852, %v848
    %v877 = vpack.c.bf16 %v853, %v849
    %v878 = vpack.c.bf16 %v858, %v854
    %v879 = vpack.c.bf16 %v859, %v855
    %v880 = vpack.c.bf16 %v860, %v856
    %v881 = vpack.c.bf16 %v861, %v857
    %v882 = vpack.c.bf16 %v866, %v862
    %v883 = vpack.c.bf16 %v867, %v863
    %v884 = vpack.c.bf16 %v868, %v864
    %v885 = vpack.c.bf16 %v869, %v865
    %v886 = vld [vmem:[#allocation5] sm:$0xf]
    %v887 = vld [vmem:[#allocation5 + $0x4] sm:$0xf]
    %v888 = vld [vmem:[#allocation5 + $0x8] sm:$0xf]
    %v889 = vld [vmem:[#allocation5 + $0xc] sm:$0xf]
    %v890 = vld [vmem:[#allocation5 + $0x10] sm:$0xf]
    %v891 = vld [vmem:[#allocation5 + $0x14] sm:$0xf]
    %v892 = vld [vmem:[#allocation5 + $0x18] sm:$0xf]
    %v893 = vld [vmem:[#allocation5 + $0x1c] sm:$0xf]
    %v894 = vld [vmem:[#allocation5 + $0x20] sm:$0xf]
    %v895 = vld [vmem:[#allocation5 + $0x24] sm:$0xf]
    %v896 = vld [vmem:[#allocation5 + $0x28] sm:$0xf]
    %v897 = vld [vmem:[#allocation5 + $0x2c] sm:$0xf]
    %v898 = vld [vmem:[#allocation5 + $0x30] sm:$0xf]
    %v899 = vld [vmem:[#allocation5 + $0x34] sm:$0xf]
    %v900 = vld [vmem:[#allocation5 + $0x38] sm:$0xf]
    %v901 = vld [vmem:[#allocation5 + $0x3c] sm:$0xf]
    %v902 = vld [vmem:[#allocation5 + $0x40] sm:$0xf]
    %v903 = vld [vmem:[#allocation5 + $0x44] sm:$0xf]
    %v904 = vld [vmem:[#allocation5 + $0x48] sm:$0xf]
    %v905 = vld [vmem:[#allocation5 + $0x4c] sm:$0xf]
    %v906 = vld [vmem:[#allocation5 + $0x50] sm:$0xf]
    %v907 = vld [vmem:[#allocation5 + $0x54] sm:$0xf]
    %v908 = vld [vmem:[#allocation5 + $0x58] sm:$0xf]
    %v909 = vld [vmem:[#allocation5 + $0x5c] sm:$0xf]
    %v910 = vld [vmem:[#allocation5 + $0x60] sm:$0xf]
    %v911 = vld [vmem:[#allocation5 + $0x64] sm:$0xf]
    %v912 = vld [vmem:[#allocation5 + $0x68] sm:$0xf]
    %v913 = vld [vmem:[#allocation5 + $0x6c] sm:$0xf]
    %v914 = vld [vmem:[#allocation5 + $0x70] sm:$0xf]
    %v915 = vld [vmem:[#allocation5 + $0x74] sm:$0xf]
    %v916 = vld [vmem:[#allocation5 + $0x78] sm:$0xf]
    %v917 = vld [vmem:[#allocation5 + $0x7c] sm:$0xf]
    %v918 = vld [vmem:[#allocation5 + $0x80] sm:$0xf]
    %v919 = vld [vmem:[#allocation5 + $0x84] sm:$0xf]
    %v920 = vld [vmem:[#allocation5 + $0x88] sm:$0xf]
    %v921 = vld [vmem:[#allocation5 + $0x8c] sm:$0xf]
    %v922 = vld [vmem:[#allocation5 + $0x90] sm:$0xf]
    %v923 = vld [vmem:[#allocation5 + $0x94] sm:$0xf]
    %v924 = vld [vmem:[#allocation5 + $0x98] sm:$0xf]
    %v925 = vld [vmem:[#allocation5 + $0x9c] sm:$0xf]
    %v926 = vld [vmem:[#allocation5 + $0xa0] sm:$0xf]
    %v927 = vld [vmem:[#allocation5 + $0xa4] sm:$0xf]
    %v928 = vld [vmem:[#allocation5 + $0xa8] sm:$0xf]
    %v929 = vld [vmem:[#allocation5 + $0xac] sm:$0xf]
    %v930 = vld [vmem:[#allocation5 + $0xb0] sm:$0xf]
    %v931 = vld [vmem:[#allocation5 + $0xb4] sm:$0xf]
    %v932 = vld [vmem:[#allocation5 + $0xb8] sm:$0xf]
    %v933 = vld [vmem:[#allocation5 + $0xbc] sm:$0xf]
    %v934 = vld [vmem:[#allocation5 + $0xc0] sm:$0xf]
    %v935 = vld [vmem:[#allocation5 + $0xc4] sm:$0xf]
    %v936 = vld [vmem:[#allocation5 + $0xc8] sm:$0xf]
    %v937 = vld [vmem:[#allocation5 + $0xcc] sm:$0xf]
    %v938 = vld [vmem:[#allocation5 + $0xd0] sm:$0xf]
    %v939 = vld [vmem:[#allocation5 + $0xd4] sm:$0xf]
    %v940 = vld [vmem:[#allocation5 + $0xd8] sm:$0xf]
    %v941 = vld [vmem:[#allocation5 + $0xdc] sm:$0xf]
    %v942 = vld [vmem:[#allocation5 + $0xe0] sm:$0xf]
    %v943 = vld [vmem:[#allocation5 + $0xe4] sm:$0xf]
    %v944 = vld [vmem:[#allocation5 + $0xe8] sm:$0xf]
    %v945 = vld [vmem:[#allocation5 + $0xec] sm:$0xf]
    %v946 = vld [vmem:[#allocation5 + $0xf0] sm:$0xf]
    %v947 = vld [vmem:[#allocation5 + $0xf4] sm:$0x3]
    %v948 = vld [vmem:[#allocation7 + $0x1] ss:$0 sm:$0xff]
    %v1011 = vunpack.c.l.b16 %v886
    %v1012 = vunpack.c.l.b16 %v887
    %v1013 = vunpack.c.l.b16 %v888
    %v1014 = vunpack.c.l.b16 %v889
    %v1015 = vunpack.c.l.b16 %v890
    %v1016 = vunpack.c.l.b16 %v891
    %v1017 = vunpack.c.l.b16 %v892
    %v1018 = vunpack.c.l.b16 %v893
    %v1019 = vunpack.c.l.b16 %v894
    %v1020 = vunpack.c.l.b16 %v895
    %v1021 = vunpack.c.l.b16 %v896
    %v1022 = vunpack.c.l.b16 %v897
    %v1023 = vunpack.c.l.b16 %v898
    %v1024 = vunpack.c.l.b16 %v899
    %v1025 = vunpack.c.l.b16 %v900
    %v1026 = vunpack.c.l.b16 %v901
    %v1027 = vunpack.c.l.b16 %v902
    %v1028 = vunpack.c.l.b16 %v903
    %v1029 = vunpack.c.l.b16 %v904
    %v1030 = vunpack.c.l.b16 %v905
    %v1031 = vunpack.c.l.b16 %v906
    %v1032 = vunpack.c.l.b16 %v907
    %v1033 = vunpack.c.l.b16 %v908
    %v1034 = vunpack.c.l.b16 %v909
    %v1035 = vunpack.c.l.b16 %v910
    %v1036 = vunpack.c.l.b16 %v911
    %v1037 = vunpack.c.l.b16 %v912
    %v1038 = vunpack.c.l.b16 %v913
    %v1039 = vunpack.c.l.b16 %v914
    %v1040 = vunpack.c.l.b16 %v915
    %v1041 = vunpack.c.l.b16 %v916
    %v1042 = vunpack.c.l.b16 %v917
    %v1043 = vunpack.c.l.b16 %v918
    %v1044 = vunpack.c.l.b16 %v919
    %v1045 = vunpack.c.l.b16 %v920
    %v1046 = vunpack.c.l.b16 %v921
    %v1047 = vunpack.c.l.b16 %v922
    %v1048 = vunpack.c.l.b16 %v923
    %v1049 = vunpack.c.l.b16 %v924
    %v1050 = vunpack.c.l.b16 %v925
    %v1051 = vunpack.c.l.b16 %v926
    %v1052 = vunpack.c.l.b16 %v927
    %v1053 = vunpack.c.l.b16 %v928
    %v1054 = vunpack.c.l.b16 %v929
    %v1055 = vunpack.c.l.b16 %v930
    %v1056 = vunpack.c.l.b16 %v931
    %v1057 = vunpack.c.l.b16 %v932
    %v1058 = vunpack.c.l.b16 %v933
    %v1059 = vunpack.c.l.b16 %v934
    %v1060 = vunpack.c.l.b16 %v935
    %v1061 = vunpack.c.l.b16 %v936
    %v1062 = vunpack.c.l.b16 %v937
    %v1063 = vunpack.c.l.b16 %v938
    %v1064 = vunpack.c.l.b16 %v939
    %v1065 = vunpack.c.l.b16 %v940
    %v1066 = vunpack.c.l.b16 %v941
    %v1067 = vunpack.c.l.b16 %v942
    %v1068 = vunpack.c.l.b16 %v943
    %v1069 = vunpack.c.l.b16 %v944
    %v1070 = vunpack.c.l.b16 %v945
    %v1071 = vunpack.c.l.b16 %v946
    %v1072 = vunpack.c.l.b16 %v947
    %v1073 = vpack.c.b16 %v1012, %v1011
    %v1074 = vpack.c.b16 %v1014, %v1013
    %v1075 = vpack.c.b16 %v1016, %v1015
    %v1076 = vpack.c.b16 %v1018, %v1017
    %v1077 = vpack.c.b16 %v1020, %v1019
    %v1078 = vpack.c.b16 %v1022, %v1021
    %v1079 = vpack.c.b16 %v1024, %v1023
    %v1080 = vpack.c.b16 %v1026, %v1025
    %v1081 = vpack.c.b16 %v1028, %v1027
    %v1082 = vpack.c.b16 %v1030, %v1029
    %v1083 = vpack.c.b16 %v1032, %v1031
    %v1084 = vpack.c.b16 %v1034, %v1033
    %v1085 = vpack.c.b16 %v1036, %v1035
    %v1086 = vpack.c.b16 %v1038, %v1037
    %v1087 = vpack.c.b16 %v1040, %v1039
    %v1088 = vpack.c.b16 %v1042, %v1041
    %v1089 = vpack.c.b16 %v1044, %v1043
    %v1090 = vpack.c.b16 %v1046, %v1045
    %v1091 = vpack.c.b16 %v1048, %v1047
    %v1092 = vpack.c.b16 %v1050, %v1049
    %v1093 = vpack.c.b16 %v1052, %v1051
    %v1094 = vpack.c.b16 %v1054, %v1053
    %v1095 = vpack.c.b16 %v1056, %v1055
    %v1096 = vpack.c.b16 %v1058, %v1057
    %v1097 = vpack.c.b16 %v1060, %v1059
    %v1098 = vpack.c.b16 %v1062, %v1061
    %v1099 = vpack.c.b16 %v1064, %v1063
    %v1100 = vpack.c.b16 %v1066, %v1065
    %v1101 = vpack.c.b16 %v1068, %v1067
    %v1102 = vpack.c.b16 %v1070, %v1069
    %v1103 = vpack.c.b16 %v1072, %v1071
    %v1135 = vsel %vm781, %v873, 0
    %v1138 = vsel %vm781, %v877, 0
    %v1141 = vsel %vm781, %v881, 0
    %v1144 = vsel %vm781, %v885, 0
    %v1147 = vsel %vm369, %v1103, 0
    %1149 = vmatpush.bf16.msra.mxu0 %v1080
    %1150 = vmatpush.bf16.msra.mxu0 %v1079
    %1151 = vmatpush.bf16.msra.mxu0 %v1078
    %1152 = vmatpush.bf16.msra.mxu0 %v1077
    %1153 = vmatpush.bf16.msra.mxu0 %v1076
    %1154 = vmatpush.bf16.msra.mxu0 %v1075
    %1155 = vmatpush.bf16.msra.mxu0 %v1074
    %1156 = vmatpush.bf16.msra.mxu0 %v1073
    %1157 = vmatmul.bf16.gmra.mxu0 %v870
    %v1158 = vpop.f32.mrf.mxu0
    %v1159 = vadd.f32 %v948, %v1158
    %v1160 = vpop.f32.mrf.mxu0
    %v1161 = vadd.f32 %v948, %v1160
    %1162 = vmatmul.bf16.gmra.mxu0 %v874
    %v1163 = vpop.f32.mrf.mxu0
    %v1164 = vadd.f32 %v948, %v1163
    %v1165 = vpop.f32.mrf.mxu0
    %v1166 = vadd.f32 %v948, %v1165
    %1167 = vmatmul.bf16.gmra.mxu0 %v878
    %v1168 = vpop.f32.mrf.mxu0
    %v1169 = vadd.f32 %v948, %v1168
    %v1170 = vpop.f32.mrf.mxu0
    %v1171 = vadd.f32 %v948, %v1170
    %1172 = vmatmul.bf16.gmra.mxu0 %v882
    %v1173 = vpop.f32.mrf.mxu0
    %v1174 = vadd.f32 %v948, %v1173
    %v1175 = vpop.f32.mrf.mxu0
    %v1176 = vadd.f32 %v948, %v1175
    %1177 = vdwg.mxu0
    %1178 = vmatpush.bf16.msra.mxu0 %v1088
    %1179 = vmatpush.bf16.msra.mxu0 %v1087
    %1180 = vmatpush.bf16.msra.mxu0 %v1086
    %1181 = vmatpush.bf16.msra.mxu0 %v1085
    %1182 = vmatpush.bf16.msra.mxu0 %v1084
    %1183 = vmatpush.bf16.msra.mxu0 %v1083
    %1184 = vmatpush.bf16.msra.mxu0 %v1082
    %1185 = vmatpush.bf16.msra.mxu0 %v1081
    %1186 = vmatmul.bf16.gmra.mxu0 %v871
    %v1187 = vpop.f32.mrf.mxu0
    %v1188 = vadd.f32 %v1159, %v1187
    %v1189 = vpop.f32.mrf.mxu0
    %v1190 = vadd.f32 %v1161, %v1189
    %1191 = vmatmul.bf16.gmra.mxu0 %v875
    %v1192 = vpop.f32.mrf.mxu0
    %v1193 = vadd.f32 %v1164, %v1192
    %v1194 = vpop.f32.mrf.mxu0
    %v1195 = vadd.f32 %v1166, %v1194
    %1196 = vmatmul.bf16.gmra.mxu0 %v879
    %v1197 = vpop.f32.mrf.mxu0
    %v1198 = vadd.f32 %v1169, %v1197
    %v1199 = vpop.f32.mrf.mxu0
    %v1200 = vadd.f32 %v1171, %v1199
    %1201 = vmatmul.bf16.gmra.mxu0 %v883
    %v1202 = vpop.f32.mrf.mxu0
    %v1203 = vadd.f32 %v1174, %v1202
    %v1204 = vpop.f32.mrf.mxu0
    %v1205 = vadd.f32 %v1176, %v1204
    %1206 = vdwg.mxu0
    %1207 = vmatpush.bf16.msra.mxu0 %v1096
    %1208 = vmatpush.bf16.msra.mxu0 %v1095
    %1209 = vmatpush.bf16.msra.mxu0 %v1094
    %1210 = vmatpush.bf16.msra.mxu0 %v1093
    %1211 = vmatpush.bf16.msra.mxu0 %v1092
    %1212 = vmatpush.bf16.msra.mxu0 %v1091
    %1213 = vmatpush.bf16.msra.mxu0 %v1090
    %1214 = vmatpush.bf16.msra.mxu0 %v1089
    %1215 = vmatmul.bf16.gmra.mxu0 %v872
    %v1216 = vpop.f32.mrf.mxu0
    %v1217 = vadd.f32 %v1188, %v1216
    %v1218 = vpop.f32.mrf.mxu0
    %v1219 = vadd.f32 %v1190, %v1218
    %1220 = vmatmul.bf16.gmra.mxu0 %v876
    %v1221 = vpop.f32.mrf.mxu0
    %v1222 = vadd.f32 %v1193, %v1221
    %v1223 = vpop.f32.mrf.mxu0
    %v1224 = vadd.f32 %v1195, %v1223
    %1225 = vmatmul.bf16.gmra.mxu0 %v880
    %v1226 = vpop.f32.mrf.mxu0
    %v1227 = vadd.f32 %v1198, %v1226
    %v1228 = vpop.f32.mrf.mxu0
    %v1229 = vadd.f32 %v1200, %v1228
    %1230 = vmatmul.bf16.gmra.mxu0 %v884
    %v1231 = vpop.f32.mrf.mxu0
    %v1232 = vadd.f32 %v1203, %v1231
    %v1233 = vpop.f32.mrf.mxu0
    %v1234 = vadd.f32 %v1205, %v1233
    %1235 = vdwg.mxu0
    %1236 = vmatpush.bf16.msra.mxu0 0
    %1237 = vmatpush.bf16.msra.mxu0 %v1147
    %1238 = vmatpush.bf16.msra.mxu0 %v1102
    %1239 = vmatpush.bf16.msra.mxu0 %v1101
    %1240 = vmatpush.bf16.msra.mxu0 %v1100
    %1241 = vmatpush.bf16.msra.mxu0 %v1099
    %1242 = vmatpush.bf16.msra.mxu0 %v1098
    %1243 = vmatpush.bf16.msra.mxu0 %v1097
    %1244 = vmatmul.bf16.gmra.mxu0 %v1135
    %v1245 = vpop.f32.mrf.mxu0
    %v1246 = vadd.f32 %v1217, %v1245
    %v1247 = vpop.f32.mrf.mxu0
    %v1248 = vadd.f32 %v1219, %v1247
    %1249 = vmatmul.bf16.gmra.mxu0 %v1138
    %v1250 = vpop.f32.mrf.mxu0
    %v1251 = vadd.f32 %v1222, %v1250
    %v1252 = vpop.f32.mrf.mxu0
    %v1253 = vadd.f32 %v1224, %v1252
    %1254 = vmatmul.bf16.gmra.mxu0 %v1141
    %v1255 = vpop.f32.mrf.mxu0
    %v1256 = vadd.f32 %v1227, %v1255
    %v1257 = vpop.f32.mrf.mxu0
    %v1258 = vadd.f32 %v1229, %v1257
    %1259 = vmatmul.bf16.gmra.mxu0 %v1144
    %v1260 = vpop.f32.mrf.mxu0
    %v1261 = vadd.f32 %v1232, %v1260
    %v1262 = vpop.f32.mrf.mxu0
    %v1263 = vadd.f32 %v1234, %v1262
    %1264 = vdwg.mxu0
    %vm1265 = vcmp.gt.f32.partialorder %v1246, 0.0
    %vm1266 = vcmp.gt.f32.partialorder %v1248, 0.0
    %vm1267 = vcmp.gt.f32.partialorder %v1251, 0.0
    %vm1268 = vcmp.gt.f32.partialorder %v1253, 0.0
    %vm1269 = vcmp.gt.f32.partialorder %v1256, 0.0
    %vm1270 = vcmp.gt.f32.partialorder %v1258, 0.0
    %vm1271 = vcmp.gt.f32.partialorder %v1261, 0.0
    %vm1272 = vcmp.gt.f32.partialorder %v1263, 0.0
    %v1273 = vmul.f32 %v1246, 0.2
    %v1274 = vmul.f32 %v1248, 0.2
    %v1275 = vmul.f32 %v1251, 0.2
    %v1276 = vmul.f32 %v1253, 0.2
    %v1277 = vmul.f32 %v1256, 0.2
    %v1278 = vmul.f32 %v1258, 0.2
    %v1279 = vmul.f32 %v1261, 0.2
    %v1280 = vmul.f32 %v1263, 0.2
    %v1281 = vsel %vm1265, %v1246, %v1273
    %v1282 = vsel %vm1266, %v1248, %v1274
    %v1283 = vsel %vm1267, %v1251, %v1275
    %v1284 = vsel %vm1268, %v1253, %v1276
    %v1285 = vsel %vm1269, %v1256, %v1277
    %v1286 = vsel %vm1270, %v1258, %v1278
    %v1287 = vsel %vm1271, %v1261, %v1279
    %v1288 = vsel %vm1272, %v1263, %v1280
    %1297 = vrot.lane.b32.xlu0 %v1281, 98
    %v1298 = vpop.permute.xlu0 %1297
    %1299 = vrot.lane.b32.xlu0 %v1282, 98
    %v1300 = vpop.permute.xlu0 %1299
    %1301 = vrot.lane.b32.xlu0 %v1283, 98
    %v1302 = vpop.permute.xlu0 %1301
    %1303 = vrot.lane.b32.xlu0 %v1284, 98
    %v1304 = vpop.permute.xlu0 %1303
    %1305 = vrot.lane.b32.xlu0 %v1285, 98
    %v1306 = vpop.permute.xlu0 %1305
    %1307 = vrot.lane.b32.xlu0 %v1286, 98
    %v1308 = vpop.permute.xlu0 %1307
    %1309 = vrot.lane.b32.xlu0 %v1287, 98
    %v1310 = vpop.permute.xlu0 %1309
    %1311 = vrot.lane.b32.xlu0 %v1288, 98
    %v1312 = vpop.permute.xlu0 %1311
    %v1321 = vmax.f32 %v1281, %v1298
    %v1322 = vmax.f32 %v1282, %v1300
    %v1323 = vmax.f32 %v1283, %v1302
    %v1324 = vmax.f32 %v1284, %v1304
    %v1325 = vmax.f32 %v1285, %v1306
    %v1326 = vmax.f32 %v1286, %v1308
    %v1327 = vmax.f32 %v1287, %v1310
    %v1328 = vmax.f32 %v1288, %v1312
    %1337 = vrot.lane.b32.xlu0 %v1321, 68
    %v1338 = vpop.permute.xlu0 %1337
    %1339 = vrot.lane.b32.xlu0 %v1322, 68
    %v1340 = vpop.permute.xlu0 %1339
    %1341 = vrot.lane.b32.xlu0 %v1323, 68
    %v1342 = vpop.permute.xlu0 %1341
    %1343 = vrot.lane.b32.xlu0 %v1324, 68
    %v1344 = vpop.permute.xlu0 %1343
    %1345 = vrot.lane.b32.xlu0 %v1325, 68
    %v1346 = vpop.permute.xlu0 %1345
    %1347 = vrot.lane.b32.xlu0 %v1326, 68
    %v1348 = vpop.permute.xlu0 %1347
    %1349 = vrot.lane.b32.xlu0 %v1327, 68
    %v1350 = vpop.permute.xlu0 %1349
    %1351 = vrot.lane.b32.xlu0 %v1328, 68
    %v1352 = vpop.permute.xlu0 %1351
    %v1361 = vmax.f32 %v1321, %v1338
    %v1362 = vmax.f32 %v1322, %v1340
    %v1363 = vmax.f32 %v1323, %v1342
    %v1364 = vmax.f32 %v1324, %v1344
    %v1365 = vmax.f32 %v1325, %v1346
    %v1366 = vmax.f32 %v1326, %v1348
    %v1367 = vmax.f32 %v1327, %v1350
    %v1368 = vmax.f32 %v1328, %v1352
    %v1369 = vpack.c.bf16 %v1362, %v1361
    %v1370 = vpack.c.bf16 %v1364, %v1363
    %v1371 = vpack.c.bf16 %v1366, %v1365
    %v1372 = vpack.c.bf16 %v1368, %v1367
    %v1373 = vld [vmem:[#allocation5 + $0xf8] sm:$0xf]
    %v1374 = vld [vmem:[#allocation5 + $0xfc] sm:$0xf]
    %v1375 = vld [vmem:[#allocation5 + $0x100] sm:$0xf]
    %v1376 = vld [vmem:[#allocation5 + $0x104] sm:$0x7]
    %v1377 = vld [vmem:[#allocation5 + $0x108] sm:$0xf]
    %v1378 = vld [vmem:[#allocation5 + $0x10c] sm:$0xf]
    %v1379 = vld [vmem:[#allocation5 + $0x110] sm:$0x3]
    %v1383 = vunpack.c.l.b16 %v1377
    %v1384 = vunpack.c.l.b16 %v1378
    %v1385 = vunpack.c.l.b16 %v1379
    %v1386 = vpack.c.b16 %v1384, %v1383
    %v1387 = vpack.c.b16 %v1385, %v1385
    %vm1389 = vcmask 154624
    %v1391 = vsel %vm1389, %v87, 0
    %v1394 = vsel %vm1389, %v88, 0
    %v1397 = vsel %vm1389, %v89, 0
    %v1400 = vsel %vm1389, %v90, 0
    %vm1402 = vcmask 1040384
    %vm1403 = vcmask 1041408
    %v1404 = vsel %vm1402, 4294967295, 65535
    %v1405 = vsel %vm1403, %v1404, 0
    %v1407 = vand.u32 %v1387, %v1405
    %1409 = vmatpush.bf16.msra.mxu0 0
    %1410 = vmatpush.bf16.msra.mxu0 0
    %1411 = vmatpush.bf16.msra.mxu0 0
    %1412 = vmatpush.bf16.msra.mxu0 0
    %1413 = vmatpush.bf16.msra.mxu0 0
    %1414 = vmatpush.bf16.msra.mxu0 0
    %1415 = vmatpush.bf16.msra.mxu0 %v1407
    %1416 = vmatpush.bf16.msra.mxu0 %v1386
    %1417 = vmatmul.bf16.gmra.mxu0 %v1391
    %v1418 = vpop.f32.mrf.mxu0
    %v1419 = vadd.f32 0.0, %v1418
    %v1420 = vpop.f32.mrf.mxu0
    %v1421 = vadd.f32 0.0, %v1420
    %1422 = vmatmul.bf16.gmra.mxu0 %v1394
    %v1423 = vpop.f32.mrf.mxu0
    %v1424 = vadd.f32 0.0, %v1423
    %v1425 = vpop.f32.mrf.mxu0
    %v1426 = vadd.f32 0.0, %v1425
    %1427 = vmatmul.bf16.gmra.mxu0 %v1397
    %v1428 = vpop.f32.mrf.mxu0
    %v1429 = vadd.f32 0.0, %v1428
    %v1430 = vpop.f32.mrf.mxu0
    %v1431 = vadd.f32 0.0, %v1430
    %1432 = vmatmul.bf16.gmra.mxu0 %v1400
    %v1433 = vpop.f32.mrf.mxu0
    %v1434 = vadd.f32 0.0, %v1433
    %v1435 = vpop.f32.mrf.mxu0
    %v1436 = vadd.f32 0.0, %v1435
    %1437 = vdwg.mxu0
    %v1442 = vunpack.c.l.b16 %v1373
    %v1443 = vunpack.c.l.b16 %v1374
    %v1444 = vunpack.c.l.b16 %v1375
    %v1445 = vunpack.c.l.b16 %v1376
    %v1446 = vpack.c.b16 %v1443, %v1442
    %v1447 = vpack.c.b16 %v1445, %v1444
    %vm1449 = vcmask 244736
    %v1451 = vsel %vm1449, %v1369, 0
    %v1454 = vsel %vm1449, %v1370, 0
    %v1457 = vsel %vm1449, %v1371, 0
    %v1460 = vsel %vm1449, %v1372, 0
    %v1463 = vsel %vm370, %v1447, 0
    %1465 = vmatpush.bf16.msra.mxu0 0
    %1466 = vmatpush.bf16.msra.mxu0 0
    %1467 = vmatpush.bf16.msra.mxu0 0
    %1468 = vmatpush.bf16.msra.mxu0 0
    %1469 = vmatpush.bf16.msra.mxu0 0
    %1470 = vmatpush.bf16.msra.mxu0 0
    %1471 = vmatpush.bf16.msra.mxu0 %v1463
    %1472 = vmatpush.bf16.msra.mxu0 %v1446
    %1473 = vmatmul.bf16.gmra.mxu0 %v1451
    %v1474 = vpop.f32.mrf.mxu0
    %v1475 = vadd.f32 %v1419, %v1474
    %v1476 = vpop.f32.mrf.mxu0
    %v1477 = vadd.f32 %v1421, %v1476
    %1478 = vmatmul.bf16.gmra.mxu0 %v1454
    %v1479 = vpop.f32.mrf.mxu0
    %v1480 = vadd.f32 %v1424, %v1479
    %v1481 = vpop.f32.mrf.mxu0
    %v1482 = vadd.f32 %v1426, %v1481
    %1483 = vmatmul.bf16.gmra.mxu0 %v1457
    %v1484 = vpop.f32.mrf.mxu0
    %v1485 = vadd.f32 %v1429, %v1484
    %v1486 = vpop.f32.mrf.mxu0
    %v1487 = vadd.f32 %v1431, %v1486
    %1488 = vmatmul.bf16.gmra.mxu0 %v1460
    %v1489 = vpop.f32.mrf.mxu0
    %v1490 = vadd.f32 %v1434, %v1489
    %v1491 = vpop.f32.mrf.mxu0
    %v1492 = vadd.f32 %v1436, %v1491
    %1493 = vdwg.mxu0
    %v1494 = vld [vmem:[#allocation7 + $0x2] ss:$0 sm:$0xff]
    %v1495 = vadd.f32 %v1475, %v1494
    %v1496 = vadd.f32 %v1477, %v1494
    %v1497 = vadd.f32 %v1480, %v1494
    %v1498 = vadd.f32 %v1482, %v1494
    %v1499 = vadd.f32 %v1485, %v1494
    %v1500 = vadd.f32 %v1487, %v1494
    %v1501 = vadd.f32 %v1490, %v1494
    %v1502 = vadd.f32 %v1492, %v1494
    %v1503 = vld [vmem:[#allocation7 + $0x3] ss:$0 sm:$0xff]
    %v1504 = vld [vmem:[#allocation7 + $0x4] ss:$0 sm:$0xff]
    %v1505 = vadd.f32 %v1495, %v1496
    %v1506 = vadd.f32 %v1505, %v1497
    %v1507 = vadd.f32 %v1506, %v1498
    %v1508 = vadd.f32 %v1507, %v1499
    %v1509 = vadd.f32 %v1508, %v1500
    %v1510 = vadd.f32 %v1509, %v1501
    %v1511 = vadd.f32 %v1510, %v1502
    %v1512 = vrot.slane %v1511, 4
    %v1513 = vadd.f32 %v1511, %v1512
    %v1514 = vrot.slane %v1513, 2
    %v1515 = vadd.f32 %v1513, %v1514
    %v1516 = vrot.slane %v1515, 1
    %v1517 = vadd.f32 %v1515, %v1516
    %v1518 = vrcp.pop 64.0
    %v1519 = vmul.f32 64.0, %v1518
    %v1520 = vsub.f32 1.0, %v1519
    %v1521 = vmul.f32 %v1518, %v1520
    %v1522 = vadd.f32 %v1518, %v1521
    %vm1523 = vweird.f32 %v1518
    %v1524 = vsel %vm1523, %v1518, %v1522
    %v1525 = vmul.f32 %v1517, %v1524
    %v1526 = vmul.f32 %v1495, %v1495
    %v1527 = vmul.f32 %v1496, %v1496
    %v1528 = vmul.f32 %v1497, %v1497
    %v1529 = vmul.f32 %v1498, %v1498
    %v1530 = vmul.f32 %v1499, %v1499
    %v1531 = vmul.f32 %v1500, %v1500
    %v1532 = vmul.f32 %v1501, %v1501
    %v1533 = vmul.f32 %v1502, %v1502
    %v1534 = vadd.f32 %v1526, %v1527
    %v1535 = vadd.f32 %v1534, %v1528
    %v1536 = vadd.f32 %v1535, %v1529
    %v1537 = vadd.f32 %v1536, %v1530
    %v1538 = vadd.f32 %v1537, %v1531
    %v1539 = vadd.f32 %v1538, %v1532
    %v1540 = vadd.f32 %v1539, %v1533
    %v1541 = vrot.slane %v1540, 4
    %v1542 = vadd.f32 %v1540, %v1541
    %v1543 = vrot.slane %v1542, 2
    %v1544 = vadd.f32 %v1542, %v1543
    %v1545 = vrot.slane %v1544, 1
    %v1546 = vadd.f32 %v1544, %v1545
    %v1547 = vmul.f32 %v1546, %v1524
    %v1548 = vmul.f32 %v1525, %v1525
    %v1549 = vsub.f32 %v1547, %v1548
    %v1550 = vmax.f32 %v1549, 0.0
    %v1551 = vsub.f32 %v1495, %v1525
    %v1552 = vsub.f32 %v1496, %v1525
    %v1553 = vsub.f32 %v1497, %v1525
    %v1554 = vsub.f32 %v1498, %v1525
    %v1555 = vsub.f32 %v1499, %v1525
    %v1556 = vsub.f32 %v1500, %v1525
    %v1557 = vsub.f32 %v1501, %v1525
    %v1558 = vsub.f32 %v1502, %v1525
    %v1559 = vadd.f32 %v1550, 1e-05
    %v1560 = vrsqrt.pop %v1559
    %v1561 = vmul.f32 %v1560, %v1559
    %v1562 = vmul.f32 %v1561, %v1560
    %v1563 = vmul.f32 0.5, %v1562
    %v1564 = vsub.f32 1.5, %v1563
    %v1565 = vmul.f32 %v1560, %v1564
    %vm1566 = vweird.f32 %v1559
    %vm1567 = vweird.f32 %v1560
    %vm1568 = vmor %vm1566, %vm1567
    %v1569 = vsel %vm1568, %v1560, %v1565
    %v1570 = vmul.f32 %v1551, %v1569
    %v1571 = vmul.f32 %v1552, %v1569
    %v1572 = vmul.f32 %v1553, %v1569
    %v1573 = vmul.f32 %v1554, %v1569
    %v1574 = vmul.f32 %v1555, %v1569
    %v1575 = vmul.f32 %v1556, %v1569
    %v1576 = vmul.f32 %v1557, %v1569
    %v1577 = vmul.f32 %v1558, %v1569
    %v1578 = vmul.f32 %v1503, %v1570
    %v1579 = vmul.f32 %v1503, %v1571
    %v1580 = vmul.f32 %v1503, %v1572
    %v1581 = vmul.f32 %v1503, %v1573
    %v1582 = vmul.f32 %v1503, %v1574
    %v1583 = vmul.f32 %v1503, %v1575
    %v1584 = vmul.f32 %v1503, %v1576
    %v1585 = vmul.f32 %v1503, %v1577
    %v1586 = vadd.f32 %v1578, %v1504
    %v1587 = vadd.f32 %v1579, %v1504
    %v1588 = vadd.f32 %v1580, %v1504
    %v1589 = vadd.f32 %v1581, %v1504
    %v1590 = vadd.f32 %v1582, %v1504
    %v1591 = vadd.f32 %v1583, %v1504
    %v1592 = vadd.f32 %v1584, %v1504
    %v1593 = vadd.f32 %v1585, %v1504
    %vm1594 = vcmp.gt.f32.partialorder %v1586, 0.0
    %vm1595 = vcmp.gt.f32.partialorder %v1587, 0.0
    %vm1596 = vcmp.gt.f32.partialorder %v1588, 0.0
    %vm1597 = vcmp.gt.f32.partialorder %v1589, 0.0
    %vm1598 = vcmp.gt.f32.partialorder %v1590, 0.0
    %vm1599 = vcmp.gt.f32.partialorder %v1591, 0.0
    %vm1600 = vcmp.gt.f32.partialorder %v1592, 0.0
    %vm1601 = vcmp.gt.f32.partialorder %v1593, 0.0
    %v1602 = vmul.f32 %v1586, 0.01
    %v1603 = vmul.f32 %v1587, 0.01
    %v1604 = vmul.f32 %v1588, 0.01
    %v1605 = vmul.f32 %v1589, 0.01
    %v1606 = vmul.f32 %v1590, 0.01
    %v1607 = vmul.f32 %v1591, 0.01
    %v1608 = vmul.f32 %v1592, 0.01
    %v1609 = vmul.f32 %v1593, 0.01
    %v1610 = vsel %vm1594, %v1586, %v1602
    %v1611 = vsel %vm1595, %v1587, %v1603
    %v1612 = vsel %vm1596, %v1588, %v1604
    %v1613 = vsel %vm1597, %v1589, %v1605
    %v1614 = vsel %vm1598, %v1590, %v1606
    %v1615 = vsel %vm1599, %v1591, %v1607
    %v1616 = vsel %vm1600, %v1592, %v1608
    %v1617 = vsel %vm1601, %v1593, %v1609
    %1618 = vst [vmem:[#allocation8] sm:$0xff] %v1610
    %1619 = vst [vmem:[#allocation8 + $0x8] sm:$0xff] %v1611
    %1620 = vst [vmem:[#allocation8 + $0x10] sm:$0xff] %v1612
    %1621 = vst [vmem:[#allocation8 + $0x18] sm:$0xff] %v1613
    %1622 = vst [vmem:[#allocation8 + $0x20] sm:$0xff] %v1614
    %1623 = vst [vmem:[#allocation8 + $0x28] sm:$0xff] %v1615
    %1624 = vst [vmem:[#allocation8 + $0x30] sm:$0xff] %v1616
    %1625 = vst [vmem:[#allocation8 + $0x38] sm:$0xff] %v1617
    // Predicated region
    $region34: #{critic_encoder_forward.1} parent=1 // pred_check
      _
    $region35: #{critic_encoder_forward.1} parent=1 // pred_check_branch
      %1627 = sbr.rel (0) target = $region37
    $region36: #{critic_encoder_forward.1} parent=1 // pred_region
      %1629 = vsyncadd [#allocation4], 0
      %s1630 = sshll.u32 [#allocation8], 4
      %s1631 = int_to_ptr.vmem [resolvable:$true] %s1630
      %s1632 = sshll.u32 %s5, 4
      %s1633 = int_to_ptr.hbm [resolvable:$true] %s1632
      %1638 = dma.vmem_to_hbm [thread:$0]  %s1631, 1024, %s1633, [#allocation4], 128, 128, 8
    $region37: #{critic_encoder_forward.1} parent=1 // pred_fallthru
      _
    // Predicated region
    $region38: #{critic_encoder_forward.1} parent=1 // pred_check
      _
    $region39: #{critic_encoder_forward.1} parent=1 // pred_check_branch
      %1640 = sbr.rel (0) target = $region41
    $region40: #{critic_encoder_forward.1} parent=1 // pred_region
      %1642 = dma.done [#allocation4], 1024
    $region41: #{critic_encoder_forward.1} parent=1 // pred_fallthru
      _
    %1643 = vsyncpa [#allocation3], 1
    %1644 = vsyncpa [#allocation6], 1
    %1645 = vsyncpa [#allocation4], 1

</llo_original>
